<compile_context>
chip_gen: v6e
topology: v6e:2x2x1
jax: 0.10.0
libtpu: 0.0.40
codegen_flags: <defaults>
</compile_context>

<pallas_src>
import functools

import jax
import jax.numpy as jnp
from jax.experimental import pallas as pl
from jax.experimental.pallas import tpu as pltpu


_TM = 512                                # row tile == A-column (k) tile
_X_RESIDENT_BYTES = 8 * 1024 * 1024      # keep X in VMEM if it fits this budget
_VMEM_LIMIT = 32 * 1024 * 1024           # safe on v5e (128 MiB), v6e (128), v7x (64)


# --------------------------------------------------------------------------
# Kernels
# --------------------------------------------------------------------------
def gcn_layer_kernel(ids_ref, cnt_ref, a_ref, x_ref, w_ref, b_ref, *refs,
                     tm, tk, num_k_tiles, x_resident, with_stats, n_valid):
    """One GCNConv layer + ReLU: relu((A @ X) @ W + b), block-sparse over A.

    grid = (row_tiles, max_nonzero_k_tiles); k is the reduction axis (last,
    "arbitrary").  ids/cnt are scalar-prefetch SMEM refs holding, per row tile,
    the compacted list of nonzero A k-tiles and their count.  acc_ref is a
    [tm, Din_pad] f32 accumulator.  When `with_stats`, the finalize also emits
    masked per-row-tile BN partial sums (sublane 0) / sums of squares (sublane 1).
    """
    if with_stats:
        o_ref, stat_ref, acc_ref = refs
    else:
        o_ref, acc_ref = refs

    i = pl.program_id(0)
    k = pl.program_id(1)

    @pl.when(k == 0)
    def _init():
        acc_ref[...] = jnp.zeros_like(acc_ref)

    nk = cnt_ref[i]

    @pl.when(k < nk)
    def _accumulate():
        if x_resident:
            sel = ids_ref[i * num_k_tiles + k]          # nonzero k-tile id
            start = pl.multiple_of(sel * tk, tk)
            xp = x_ref[pl.ds(start, tk), :]
        else:
            xp = x_ref[...]                              # panel fetched via index_map
        # bf16 x bf16 -> f32 accumulate on the MXU (the N^2-scale matmul).
        acc_ref[...] += jnp.dot(a_ref[...], xp,
                                preferred_element_type=jnp.float32)

    @pl.when(k == pl.num_programs(1) - 1)
    def _finalize():
        # bf16 epilogue matmul (accumulator cast, W pre-cast), f32 accumulate.
        h = jnp.dot(acc_ref[...].astype(jnp.bfloat16), w_ref[...],
                    preferred_element_type=jnp.float32) + b_ref[...]
        h = jnp.maximum(h, 0.0)
        o_ref[...] = h.astype(o_ref.dtype)
        if with_stats:
            # Mask padded rows out of the batch statistics.
            row = i * tm + jax.lax.broadcasted_iota(jnp.int32, (tm, 1), 0)
            hm = jnp.where(row < n_valid, h, 0.0)
            hs = jnp.sum(hm, axis=0, keepdims=True)          # (1, D)
            hq = jnp.sum(hm * hm, axis=0, keepdims=True)     # (1, D)
            pad = jnp.zeros((6, hs.shape[1]), jnp.float32)
            stat_ref[...] = jnp.concatenate([hs, hq, pad], axis=0)[None]


def bn_apply_kernel(h_ref, sum_ref, sq_ref, gamma_ref, beta_ref, o_ref,
                    *, inv_n, eps):
    """BatchNorm1d normalize (training mode: batch mean, biased variance)."""
    mean = sum_ref[...] * inv_n
    var = jnp.maximum(sq_ref[...] * inv_n - mean * mean, 0.0)
    inv_std = jax.lax.rsqrt(var + eps)
    h = h_ref[...].astype(jnp.float32)
    o_ref[...] = ((h - mean) * inv_std * gamma_ref[...]
                  + beta_ref[...]).astype(o_ref.dtype)


# --------------------------------------------------------------------------
# pallas_call wrappers
# --------------------------------------------------------------------------
def _round_up(x, m):
    return ((x + m - 1) // m) * m


def _pad2(a, rows, cols, value=0.0):
    return jnp.pad(a, ((0, rows - a.shape[0]), (0, cols - a.shape[1])),
                   constant_values=value)


def _block_structure(a_p, tm, tk):
    """Per-row-tile compacted nonzero-k-tile ids + counts for block-sparse A."""
    n_pad = a_p.shape[0]
    r = n_pad // tm
    kt = n_pad // tk
    blk = jnp.any(a_p.reshape(r, tm, kt, tk) != 0, axis=(1, 3))      # (r, kt)
    cnt = jnp.sum(blk, axis=1).astype(jnp.int32)                      # (r,)
    # Ascending sort on (0 for nonzero, 1 for zero) puts nonzero tile ids first.
    ids = jnp.argsort(jnp.where(blk, 0, 1), axis=1).astype(jnp.int32).reshape(-1)
    try:
        max_k = max(int(jnp.max(cnt)), 1)
        nnz = max(int(jnp.sum(cnt)), 1)
    except jax.errors.ConcretizationTypeError:
        # Under jit the structure is traced: fall back to dense iteration.
        max_k, nnz = kt, r * kt
    return ids, cnt, max_k, nnz


def _gcn_layer(ids, cnt, a, x, w, b, *, tm, tk, max_k, nnz_tiles, out_dtype,
               with_stats=False, n_valid=0):
    """relu((A @ X) @ W + b); A:[Np,Np] bf16 (block-sparse), X bf16, W bf16, b f32."""
    n_pad = a.shape[0]
    din = x.shape[1]
    dout = w.shape[1]
    num_k_tiles = n_pad // tk
    row_tiles = n_pad // tm
    grid = (row_tiles, max_k)

    x_bytes = x.size * x.dtype.itemsize
    x_resident = x_bytes <= _X_RESIDENT_BYTES
    if x_resident:
        # Constant index map -> X is DMA'd exactly once for the whole grid.
        x_spec = pl.BlockSpec((n_pad, din), lambda i, k, ids_r, cnt_r: (0, 0))
        x_read_bytes = x_bytes
    else:
        def x_map(i, k, ids_r, cnt_r):
            kk = jnp.maximum(jnp.minimum(k, cnt_r[i] - 1), 0)
            return (ids_r[i * num_k_tiles + kk], 0)
        x_spec = pl.BlockSpec((tk, din), x_map)
        x_read_bytes = nnz_tiles * tk * din * x.dtype.itemsize

    def a_map(i, k, ids_r, cnt_r):
        # Clamp so skipped steps (k >= cnt[i]) re-select the previous tile,
        # which Pallas does not re-DMA; the kernel guards the accumulation.
        kk = jnp.maximum(jnp.minimum(k, cnt_r[i] - 1), 0)
        return (i, ids_r[i * num_k_tiles + kk])

    out_shapes = [jax.ShapeDtypeStruct((n_pad, dout), out_dtype)]
    out_specs = [pl.BlockSpec((tm, dout), lambda i, k, ids_r, cnt_r: (i, 0))]
    if with_stats:
        out_shapes.append(jax.ShapeDtypeStruct((row_tiles, 8, dout), jnp.float32))
        out_specs.append(
            pl.BlockSpec((1, 8, dout), lambda i, k, ids_r, cnt_r: (i, 0, 0)))

    kernel = functools.partial(
        gcn_layer_kernel, tm=tm, tk=tk, num_k_tiles=num_k_tiles,
        x_resident=x_resident, with_stats=with_stats, n_valid=n_valid)

    out_bytes = n_pad * dout * jnp.dtype(out_dtype).itemsize
    cost = pl.CostEstimate(
        flops=2 * nnz_tiles * tm * tk * din + 2 * n_pad * din * dout,
        transcendentals=0,
        bytes_accessed=int(nnz_tiles * tm * tk * a.dtype.itemsize + x_read_bytes
                           + w.size * w.dtype.itemsize + b.size * 4 + out_bytes),
    )

    outs = pl.pallas_call(
        kernel,
        out_shape=tuple(out_shapes),
        grid_spec=pltpu.PrefetchScalarGridSpec(
            num_scalar_prefetch=2,
            grid=grid,
            in_specs=[
                pl.BlockSpec((tm, tk), a_map),                              # A panel
                x_spec,                                                     # X
                pl.BlockSpec((din, dout), lambda i, k, ids_r, cnt_r: (0, 0)),  # W
                pl.BlockSpec((1, dout), lambda i, k, ids_r, cnt_r: (0, 0)),    # bias
            ],
            out_specs=tuple(out_specs),
            scratch_shapes=[pltpu.VMEM((tm, din), jnp.float32)],
        ),
        compiler_params=pltpu.CompilerParams(
            dimension_semantics=("parallel", "arbitrary"),
            vmem_limit_bytes=_VMEM_LIMIT),
        cost_estimate=cost,
    )(ids, cnt, a, x, w, b)

    if with_stats:
        return outs[0], outs[1]
    return outs[0]


def _bn_apply(h, s, sq, gamma, beta, *, n_valid, tm):
    n_pad, dpad = h.shape
    kernel = functools.partial(bn_apply_kernel, inv_n=1.0 / n_valid, eps=1e-5)
    return pl.pallas_call(
        kernel,
        out_shape=jax.ShapeDtypeStruct((n_pad, dpad), jnp.float32),
        grid_spec=pltpu.PrefetchScalarGridSpec(
            num_scalar_prefetch=0,
            grid=(n_pad // tm,),
            in_specs=[
                pl.BlockSpec((tm, dpad), lambda i: (i, 0)),
                pl.BlockSpec((1, dpad), lambda i: (0, 0)),
                pl.BlockSpec((1, dpad), lambda i: (0, 0)),
                pl.BlockSpec((1, dpad), lambda i: (0, 0)),
                pl.BlockSpec((1, dpad), lambda i: (0, 0)),
            ],
            out_specs=pl.BlockSpec((tm, dpad), lambda i: (i, 0)),
        ),
        compiler_params=pltpu.CompilerParams(
            dimension_semantics=("parallel",),
            vmem_limit_bytes=_VMEM_LIMIT),
    )(h, s, sq, gamma, beta)


# --------------------------------------------------------------------------
# Graph glue (plain JAX) and top-level block
# --------------------------------------------------------------------------
def build_norm_adjacency(edge_index, num_nodes):
    """Dense D^{-1/2}(A + remaining self loops)D^{-1/2}, matching PyG gcn_norm."""
    src = edge_index[0]
    dst = edge_index[1]
    adj = jnp.zeros((num_nodes, num_nodes), dtype=jnp.float32)
    adj = adj.at[dst, src].add(1.0)
    diag = jnp.diagonal(adj)
    adj = adj + jnp.diag(jnp.where(diag > 0, 0.0, 1.0))
    deg = jnp.sum(adj, axis=1)
    d_inv_sqrt = jnp.where(deg > 0, jax.lax.rsqrt(deg), 0.0)
    return d_inv_sqrt[:, None] * adj * d_inv_sqrt[None, :]


def gcn_block(x, edge_index, params):
    """x: [N, Din] float32, edge_index: [2, E] int32. Returns [N, Dout] float32."""
    n, din = x.shape
    w1, b1, w2, b2, gamma, beta = params
    dout = w1.shape[1]

    tm = _TM
    tk = _TM
    n_pad = _round_up(n, tm)
    din_p = _round_up(din, 128)
    dout_p = _round_up(dout, 128)

    a_norm = build_norm_adjacency(edge_index, n)
    a_p = _pad2(a_norm, n_pad, n_pad).astype(jnp.bfloat16)    # halve HBM traffic on A
    x_p = _pad2(x, n_pad, din_p).astype(jnp.bfloat16)
    w1_p = _pad2(w1, din_p, dout_p).astype(jnp.bfloat16)      # bf16 epilogue matmul
    w2_p = _pad2(w2, dout_p, dout_p).astype(jnp.bfloat16)
    b1_p = _pad2(b1, 1, dout_p)
    b2_p = _pad2(b2, 1, dout_p)
    gamma_p = _pad2(gamma, 1, dout_p, value=1.0)
    beta_p = _pad2(beta, 1, dout_p)

    # Block-sparsity metadata for A (shared by both layers).
    ids, cnt, max_k, nnz = _block_structure(a_p, tm, tk)

    # Layer 1 (bf16 output feeds layer 2), layer 2 (bf16 output + fused BN stats).
    h1 = _gcn_layer(ids, cnt, a_p, x_p, w1_p, b1_p, tm=tm, tk=tk,
                    max_k=max_k, nnz_tiles=nnz, out_dtype=jnp.bfloat16)
    h2, stats = _gcn_layer(ids, cnt, a_p, h1, w2_p, b2_p, tm=tm, tk=tk,
                           max_k=max_k, nnz_tiles=nnz, out_dtype=jnp.bfloat16,
                           with_stats=True, n_valid=n)

    # Tiny (row_tiles, D) reduction of the fused partial statistics.
    s = jnp.sum(stats[:, 0:1, :], axis=0)     # (1, dout_p) per-feature sum
    sq = jnp.sum(stats[:, 1:2, :], axis=0)    # (1, dout_p) per-feature sum of squares

    out_p = _bn_apply(h2, s, sq, gamma_p, beta_p, n_valid=n, tm=tm)
    return out_p[:n, :dout]


def init_params(key, in_dim, out_dim):
    """Glorot-uniform weights, zero biases (GCNConv default), gamma=1/beta=0."""
    k1, k2 = jax.random.split(key)

    def glorot(k, fan_in, fan_out):
        limit = jnp.sqrt(6.0 / (fan_in + fan_out))
        return jax.random.uniform(k, (fan_in, fan_out), jnp.float32, -limit, limit)

    w1 = glorot(k1, in_dim, out_dim)
    b1 = jnp.zeros((1, out_dim), jnp.float32)
    w2 = glorot(k2, out_dim, out_dim)
    b2 = jnp.zeros((1, out_dim), jnp.float32)
    gamma = jnp.ones((1, out_dim), jnp.float32)
    beta = jnp.zeros((1, out_dim), jnp.float32)
    return (w1, b1, w2, b2, gamma, beta)


if __name__ == "__main__":
    key = jax.random.PRNGKey(0)
    k_x, k_e, k_p = jax.random.split(key, 3)

    num_nodes = 8
    in_dim = 16
    out_dim = 32
    num_edges = 16

    x = jax.random.normal(k_x, (num_nodes, in_dim), jnp.float32)
    edge_index = jax.random.randint(k_e, (2, num_edges), 0, num_nodes, jnp.int32)
    params = init_params(k_p, in_dim, out_dim)

    out = gcn_block(x, edge_index, params)
    jax.block_until_ready(out)
    assert out.shape == (num_nodes, out_dim)
    assert bool(jnp.all(jnp.isfinite(out)))
    print("KERNEL_OK")
</pallas_src>

<mosaic_0001>
module attributes {stable_mosaic.version = 11 : i64} {
  func.func @gcn_layer_kernel(%arg0: i32, %arg1: i32, %arg2: memref<1xi32, #tpu.memory_space<smem>>, %arg3: memref<1xi32, #tpu.memory_space<smem>>, %arg4: memref<512x512xbf16, #tpu.memory_space<vmem>>, %arg5: memref<512x128xbf16, #tpu.memory_space<vmem>>, %arg6: memref<128x128xbf16, #tpu.memory_space<vmem>>, %arg7: memref<1x128xf32, #tpu.memory_space<vmem>>, %arg8: memref<512x128xbf16, #tpu.memory_space<vmem>>, %arg9: memref<512x128xf32, #tpu.memory_space<vmem>>) attributes {dimension_semantics = [#tpu.dimension_semantics<parallel>, #tpu.dimension_semantics<arbitrary>], iteration_bounds = array<i64: 1, 1>, scalar_prefetch = 2 : i64, scratch_operands = 1 : i64, tpu.core_type = #tpu.core_type<tc>, window_params = [{transform_indices = @transform_0, window_bounds = array<i64: 512, 512>}, {pipeline_mode = #tpu.pipeline_mode<synchronous>, transform_indices = @transform_1, window_bounds = array<i64: 512, 128>}, {pipeline_mode = #tpu.pipeline_mode<synchronous>, transform_indices = @transform_2, window_bounds = array<i64: 128, 128>}, {pipeline_mode = #tpu.pipeline_mode<synchronous>, transform_indices = @transform_3, window_bounds = array<i64: 1, 128>}, {transform_indices = @transform_4, window_bounds = array<i64: 512, 128>}]} {
    %c0_i32 = arith.constant 0 : i32
    %0 = arith.cmpi eq, %arg1, %c0_i32 : i32
    %1 = arith.extui %0 : i1 to i32
    %c0_i32_0 = arith.constant 0 : i32
    %2 = arith.cmpi ne, %1, %c0_i32_0 : i32
    scf.if %2 {
      %cst = arith.constant 0.000000e+00 : f32
      %11 = vector.broadcast %cst : f32 to vector<512x128xf32>
      %c0 = arith.constant 0 : index
      %c0_4 = arith.constant 0 : index
      %12 = vector.load %arg9[%c0, %c0_4] : memref<512x128xf32, #tpu.memory_space<vmem>>, vector<512x128xf32>
      tpu.vector_store %arg9[%c0, %c0_4], %11 {strides = array<i32>} : memref<512x128xf32, #tpu.memory_space<vmem>>, vector<512x128xf32>,
    } else {
    }
    %3 = arith.index_cast %arg0 : i32 to index
    %4 = memref.load %arg3[%3] : memref<1xi32, #tpu.memory_space<smem>>
    %5 = arith.cmpi slt, %arg1, %4 : i32
    %6 = arith.extui %5 : i1 to i32
    %c0_i32_1 = arith.constant 0 : i32
    %7 = arith.cmpi ne, %6, %c0_i32_1 : i32
    scf.if %7 {
      %c1_i32 = arith.constant 1 : i32
      %11 = arith.muli %arg0, %c1_i32 : i32
      %12 = arith.addi %11, %arg1 : i32
      %13 = arith.index_cast %12 : i32 to index
      %14 = memref.load %arg2[%13] : memref<1xi32, #tpu.memory_space<smem>>
      %c512_i32 = arith.constant 512 : i32
      %15 = arith.muli %14, %c512_i32 : i32
      %16 = tpu.assume_multiple %15, 512 : i32
      %17 = arith.index_cast %16 : i32 to index
      %c0 = arith.constant 0 : index
      %18 = vector.load %arg5[%17, %c0] : memref<512x128xbf16, #tpu.memory_space<vmem>>, vector<512x128xbf16>
      %c0_4 = arith.constant 0 : index
      %c0_5 = arith.constant 0 : index
      %19 = vector.load %arg9[%c0_4, %c0_5] : memref<512x128xf32, #tpu.memory_space<vmem>>, vector<512x128xf32>
      %c0_6 = arith.constant 0 : index
      %c0_7 = arith.constant 0 : index
      %20 = vector.load %arg4[%c0_6, %c0_7] : memref<512x512xbf16, #tpu.memory_space<vmem>>, vector<512x512xbf16>
      %cst = arith.constant dense<0.000000e+00> : vector<512x128xf32>
      %21 = tpu.matmul %20, %18, %cst {dimension_numbers = #tpu.dot_dimension_numbers<[1], [0], [0], [1], [0, 0, 1, 1], [], []>} : vector<512x512xbf16>, vector<512x128xbf16>, vector<512x128xf32> -> vector<512x128xf32>
      %22 = arith.addf %19, %21 : vector<512x128xf32>
      %c0_8 = arith.constant 0 : index
      %c0_9 = arith.constant 0 : index
      %23 = vector.load %arg9[%c0_8, %c0_9] : memref<512x128xf32, #tpu.memory_space<vmem>>, vector<512x128xf32>
      tpu.vector_store %arg9[%c0_8, %c0_9], %22 {strides = array<i32>} : memref<512x128xf32, #tpu.memory_space<vmem>>, vector<512x128xf32>,
    } else {
    }
    %c0_i32_2 = arith.constant 0 : i32
    %8 = arith.cmpi eq, %arg1, %c0_i32_2 : i32
    %9 = arith.extui %8 : i1 to i32
    %c0_i32_3 = arith.constant 0 : i32
    %10 = arith.cmpi ne, %9, %c0_i32_3 : i32
    scf.if %10 {
      %c0 = arith.constant 0 : index
      %c0_4 = arith.constant 0 : index
      %11 = vector.load %arg9[%c0, %c0_4] : memref<512x128xf32, #tpu.memory_space<vmem>>, vector<512x128xf32>
      %12 = arith.truncf %11 : vector<512x128xf32> to vector<512x128xbf16>
      %c0_5 = arith.constant 0 : index
      %c0_6 = arith.constant 0 : index
      %13 = vector.load %arg6[%c0_5, %c0_6] : memref<128x128xbf16, #tpu.memory_space<vmem>>, vector<128x128xbf16>
      %cst = arith.constant dense<0.000000e+00> : vector<512x128xf32>
      %14 = tpu.matmul %12, %13, %cst {dimension_numbers = #tpu.dot_dimension_numbers<[1], [0], [0], [1], [0, 0, 1, 1], [], []>} : vector<512x128xbf16>, vector<128x128xbf16>, vector<512x128xf32> -> vector<512x128xf32>
      %c0_7 = arith.constant 0 : index
      %c0_8 = arith.constant 0 : index
      %15 = vector.load %arg7[%c0_7, %c0_8] : memref<1x128xf32, #tpu.memory_space<vmem>>, vector<1x128xf32>
      %16 = vector.broadcast %15 : vector<1x128xf32> to vector<512x128xf32>
      %17 = arith.addf %14, %16 : vector<512x128xf32>
      %cst_9 = arith.constant 0.000000e+00 : f32
      %18 = vector.broadcast %cst_9 : f32 to vector<512x128xf32>
      %19 = arith.maximumf %17, %18 : vector<512x128xf32>
      %20 = arith.truncf %19 : vector<512x128xf32> to vector<512x128xbf16>
      %c0_10 = arith.constant 0 : index
      %c0_11 = arith.constant 0 : index
      %21 = vector.load %arg8[%c0_10, %c0_11] : memref<512x128xbf16, #tpu.memory_space<vmem>>, vector<512x128xbf16>
      tpu.vector_store %arg8[%c0_10, %c0_11], %20 {strides = array<i32>} : memref<512x128xbf16, #tpu.memory_space<vmem>>, vector<512x128xbf16>,
    } else {
    }
    return
  }
  func.func @transform_0(%arg0: i32, %arg1: i32, %arg2: memref<1xi32, #tpu.memory_space<smem>>, %arg3: memref<1xi32, #tpu.memory_space<smem>>) -> (i32, i32) {
    %0 = arith.index_cast %arg0 : i32 to index
    %1 = memref.load %arg3[%0] : memref<1xi32, #tpu.memory_space<smem>>
    %c1_i32 = arith.constant 1 : i32
    %2 = arith.subi %1, %c1_i32 : i32
    %3 = arith.minsi %arg1, %2 : i32
    %c0_i32 = arith.constant 0 : i32
    %4 = arith.maxsi %3, %c0_i32 : i32
    %c1_i32_0 = arith.constant 1 : i32
    %5 = arith.muli %arg0, %c1_i32_0 : i32
    %6 = arith.addi %5, %4 : i32
    %7 = arith.index_cast %6 : i32 to index
    %8 = memref.load %arg2[%7] : memref<1xi32, #tpu.memory_space<smem>>
    %c0_i32_1 = arith.constant 0 : i32
    return %arg0, %8 : i32, i32
  }
  func.func @transform_1(%arg0: i32, %arg1: i32, %arg2: memref<1xi32, #tpu.memory_space<smem>>, %arg3: memref<1xi32, #tpu.memory_space<smem>>) -> (i32, i32) {
    %c0_i32 = arith.constant 0 : i32
    %c0_i32_0 = arith.constant 0 : i32
    %c0_i32_1 = arith.constant 0 : i32
    return %c0_i32, %c0_i32_0 : i32, i32
  }
  func.func @transform_2(%arg0: i32, %arg1: i32, %arg2: memref<1xi32, #tpu.memory_space<smem>>, %arg3: memref<1xi32, #tpu.memory_space<smem>>) -> (i32, i32) {
    %c0_i32 = arith.constant 0 : i32
    %c0_i32_0 = arith.constant 0 : i32
    %c0_i32_1 = arith.constant 0 : i32
    return %c0_i32, %c0_i32_0 : i32, i32
  }
  func.func @transform_3(%arg0: i32, %arg1: i32, %arg2: memref<1xi32, #tpu.memory_space<smem>>, %arg3: memref<1xi32, #tpu.memory_space<smem>>) -> (i32, i32) {
    %c0_i32 = arith.constant 0 : i32
    %c0_i32_0 = arith.constant 0 : i32
    %c0_i32_1 = arith.constant 0 : i32
    return %c0_i32, %c0_i32_0 : i32, i32
  }
  func.func @transform_4(%arg0: i32, %arg1: i32, %arg2: memref<1xi32, #tpu.memory_space<smem>>, %arg3: memref<1xi32, #tpu.memory_space<smem>>) -> (i32, i32) {
    %c0_i32 = arith.constant 0 : i32
    %c0_i32_0 = arith.constant 0 : i32
    return %arg0, %c0_i32 : i32, i32
  }
}

</mosaic_0001>

<llo_original>
// kernel: tpu_custom_call.1
$region0: #{tpu_custom_call.1}
  #allocation0 [shape = 'u32[]', space=smem, size = 0x4, offset = 0x4, fixed_abs, tag = 'smem constant byte address 0x4 - core index']
  #allocation1 [shape = 'u32[144,128]{1,0:T(1,128)}', space=vmem, size = 0x12000, scoped, tag = 'internal scratch']
  #allocation2 [shape = 'f32[512,128]{1,0:T(8,128)}', space=vmem, size = 0x40000, scoped, tag = 'scratch operand']
  #allocation3 [shape = 's32[1]{0}', space=sflag, size = 0x4, scoped, tag = 'scoped memory for tpu_custom_call.1']
  #allocation4 [shape = 's32[1]{0:T(128)S(6)}', space=smem, size = 0x200, scoped, tag = 'prefetched SMEM operand 0']
  #allocation5 [shape = 's32[1]{0:T(128)S(6)}', space=smem, size = 0x200, scoped, tag = 'prefetched SMEM operand 1']
  %s0 = inlined_call_operand.<no memory space> [shape: s32[1], index: 0, kind: input, shape index: {}]
  %s1 = inlined_call_operand.<no memory space> [shape: s32[1], index: 1, kind: input, shape index: {}]
  %s2 = inlined_call_operand.hbm [shape: bf16[512,512], index: 2, kind: input, shape index: {}]
  %s3 = inlined_call_operand.hbm [shape: bf16[512,128], index: 3, kind: input, shape index: {}]
  %s4 = inlined_call_operand.hbm [shape: bf16[128,128], index: 4, kind: input, shape index: {}]
  %s5 = inlined_call_operand.vmem [shape: f32[1,128], index: 5, kind: input, shape index: {}]
  %s6 = inlined_call_operand.hbm [shape: bf16[512,128], index: 6, kind: output, shape index: {}]
  %s7 = sld [smem:[#allocation0]]
  $region50: #{tpu_custom_call.1} parent=0
    _
  %s9 = ssub.s32 1, %s7
  %s10 = scalar_select 0, %s9, %s7
  %11 = sst [smem:[#allocation4]] %s0
  %12 = sst [smem:[#allocation5]] %s1
  $region1: #{tpu_custom_call.1} parent=0
    #allocation6 [shape = 'u8[524288]{0}', space=vmem, size = 0x80000, scoped, tag = 'input window, operand 2, single buffered']
    #allocation7 [shape = 's32[1]{0}', space=sflag, size = 0x4, scoped, tag = 'scoped memory for tpu_custom_call.1']
    #allocation8 [shape = 's32[1]{0}', space=sflag, size = 0x4, scoped, tag = 'scoped memory for tpu_custom_call.1']
    #allocation9 [shape = 'u8[131072]{0}', space=vmem, size = 0x20000, scoped, tag = 'input window, operand 3, single buffered']
    #allocation10 [shape = 's32[1]{0}', space=sflag, size = 0x4, scoped, tag = 'scoped memory for tpu_custom_call.1']
    #allocation11 [shape = 'u8[32768]{0}', space=vmem, size = 0x8000, scoped, tag = 'input window, operand 4, single buffered']
    #allocation12 [shape = 'u8[131072]{0}', space=vmem, size = 0x20000, scoped, tag = 'output window, operand 0, single buffered']
    %13 = vsyncpa [#allocation7], 0
    %14 = vsyncpa [#allocation10], 0
    %15 = vsyncpa [#allocation8], 0
    // Predicated region
    $region2: #{tpu_custom_call.1} parent=1 // pred_check
      _
    $region3: #{tpu_custom_call.1} parent=1 // pred_check_branch
      %17 = sbr.rel (0) target = $region5
    $region4: #{tpu_custom_call.1} parent=1 // pred_region
      %s18 = sld [smem:[#allocation5]]
      %s19 = ssub.s32 %s18, 1
      %p20 = scmp.lt.s32.totalorder 0, %s19
      %s21 = scalar_select %p20, 0, %s19
      %p22 = scmp.gt.s32.totalorder %s21, 0
      %s23 = scalar_select %p22, %s21, 0
      %s24 = sadd.s32 0, %s23
      %s25 = sld [smem:[#allocation4 + %s24]]
      %s26 = smul.u32 4, %s25
      %s28 = ssub.s32 16384, 16384
      %29 = vsyncadd [#allocation7], %s28
      %s30 = smul.addr %s26, 64
      %s31 = scalar_lea.hbm %s2, %s30
      %s32 = sshll.u32 [#allocation6], 4
      %s33 = int_to_ptr.vmem [resolvable:$true] %s32
      %38 = dma.hbm_to_vmem [thread:$0]  %s31, 16384, %s33, [#allocation7], 256, 256, 16
    $region5: #{tpu_custom_call.1} parent=1 // pred_fallthru
      _
    // Predicated region
    $region6: #{tpu_custom_call.1} parent=1 // pred_check
      _
    $region7: #{tpu_custom_call.1} parent=1 // pred_check_branch
      %40 = sbr.rel (0) target = $region9
    $region8: #{tpu_custom_call.1} parent=1 // pred_region
      %s42 = ssub.s32 4096, 4096
      %43 = vsyncadd [#allocation10], %s42
      %s44 = sshll.u32 [#allocation9], 4
      %s45 = int_to_ptr.vmem [resolvable:$true] %s44
      %50 = dma.hbm_to_vmem [thread:$0]  %s3, 4096, %s45, [#allocation10], 64, 64, 4
    $region9: #{tpu_custom_call.1} parent=1 // pred_fallthru
      _
    // Predicated region
    $region10: #{tpu_custom_call.1} parent=1 // pred_check
      _
    $region11: #{tpu_custom_call.1} parent=1 // pred_check_branch
      %52 = sbr.rel (0) target = $region13
    $region12: #{tpu_custom_call.1} parent=1 // pred_region
      %s54 = ssub.s32 1024, 1024
      %55 = vsyncadd [#allocation10], %s54
      %s56 = sshll.u32 [#allocation11], 4
      %s57 = int_to_ptr.vmem [resolvable:$true] %s56
      %62 = dma.hbm_to_vmem [thread:$0]  %s4, 1024, %s57, [#allocation10], 64, 64, 4
    $region13: #{tpu_custom_call.1} parent=1 // pred_fallthru
      _
    // Predicated region
    $region14: #{tpu_custom_call.1} parent=1 // pred_check
      _
    $region15: #{tpu_custom_call.1} parent=1 // pred_check_branch
      %64 = sbr.rel (0) target = $region17
    $region16: #{tpu_custom_call.1} parent=1 // pred_region
      _
    $region17: #{tpu_custom_call.1} parent=1 // pred_fallthru
      _
    // Predicated region
    $region18: #{tpu_custom_call.1} parent=1 // pred_check
      _
    $region19: #{tpu_custom_call.1} parent=1 // pred_check_branch
      %66 = sbr.rel (0) target = $region21
    $region20: #{tpu_custom_call.1} parent=1 // pred_region
      %67 = dma.done [#allocation7], 16384
    $region21: #{tpu_custom_call.1} parent=1 // pred_fallthru
      _
    // Predicated region
    $region22: #{tpu_custom_call.1} parent=1 // pred_check
      _
    $region23: #{tpu_custom_call.1} parent=1 // pred_check_branch
      %69 = sbr.rel (0) target = $region25
    $region24: #{tpu_custom_call.1} parent=1 // pred_region
      %70 = dma.done [#allocation10], 4096
    $region25: #{tpu_custom_call.1} parent=1 // pred_fallthru
      _
    // Predicated region
    $region26: #{tpu_custom_call.1} parent=1 // pred_check
      _
    $region27: #{tpu_custom_call.1} parent=1 // pred_check_branch
      %72 = sbr.rel (0) target = $region29
    $region28: #{tpu_custom_call.1} parent=1 // pred_region
      %73 = dma.done [#allocation10], 1024
    $region29: #{tpu_custom_call.1} parent=1 // pred_fallthru
      _
    %s74 = sld [smem:[#allocation5]]
    %s75 = ssub.s32 %s74, 1
    %p76 = scmp.lt.s32.totalorder 0, %s75
    %s77 = scalar_select %p76, 0, %s75
    %p78 = scmp.gt.s32.totalorder %s77, 0
    %s79 = scalar_select %p78, %s77, 0
    %s80 = sadd.s32 0, %s79
    %s81 = sld [smem:[#allocation4 + %s80]]
    %s82 = smul.u32 4, %s81
    %p84 = scmp.eq.s32.totalorder 0, 0
    // Predicated region
    $region30: #{tpu_custom_call.1} parent=1 // pred_check
      %p85 = pneg %p84
    $region31: #{tpu_custom_call.1} parent=1 // pred_check_branch
      %87 = sbr.rel (%p85) target = $region33
    $region32: #{tpu_custom_call.1} parent=1 // pred_region
      %88 = vst [vmem:[#allocation2] sm:$0xff] 0.0
      %89 = vst [vmem:[#allocation2 + $0x8] sm:$0xff] 0.0
      %90 = vst [vmem:[#allocation2 + $0x10] sm:$0xff] 0.0
      %91 = vst [vmem:[#allocation2 + $0x18] sm:$0xff] 0.0
      %92 = vst [vmem:[#allocation2 + $0x20] sm:$0xff] 0.0
      %93 = vst [vmem:[#allocation2 + $0x28] sm:$0xff] 0.0
      %94 = vst [vmem:[#allocation2 + $0x30] sm:$0xff] 0.0
      %95 = vst [vmem:[#allocation2 + $0x38] sm:$0xff] 0.0
      %96 = vst [vmem:[#allocation2 + $0x40] sm:$0xff] 0.0
      %97 = vst [vmem:[#allocation2 + $0x48] sm:$0xff] 0.0
      %98 = vst [vmem:[#allocation2 + $0x50] sm:$0xff] 0.0
      %99 = vst [vmem:[#allocation2 + $0x58] sm:$0xff] 0.0
      %100 = vst [vmem:[#allocation2 + $0x60] sm:$0xff] 0.0
      %101 = vst [vmem:[#allocation2 + $0x68] sm:$0xff] 0.0
      %102 = vst [vmem:[#allocation2 + $0x70] sm:$0xff] 0.0
      %103 = vst [vmem:[#allocation2 + $0x78] sm:$0xff] 0.0
      %104 = vst [vmem:[#allocation2 + $0x80] sm:$0xff] 0.0
      %105 = vst [vmem:[#allocation2 + $0x88] sm:$0xff] 0.0
      %106 = vst [vmem:[#allocation2 + $0x90] sm:$0xff] 0.0
      %107 = vst [vmem:[#allocation2 + $0x98] sm:$0xff] 0.0
      %108 = vst [vmem:[#allocation2 + $0xa0] sm:$0xff] 0.0
      %109 = vst [vmem:[#allocation2 + $0xa8] sm:$0xff] 0.0
      %110 = vst [vmem:[#allocation2 + $0xb0] sm:$0xff] 0.0
      %111 = vst [vmem:[#allocation2 + $0xb8] sm:$0xff] 0.0
      %112 = vst [vmem:[#allocation2 + $0xc0] sm:$0xff] 0.0
      %113 = vst [vmem:[#allocation2 + $0xc8] sm:$0xff] 0.0
      %114 = vst [vmem:[#allocation2 + $0xd0] sm:$0xff] 0.0
      %115 = vst [vmem:[#allocation2 + $0xd8] sm:$0xff] 0.0
      %116 = vst [vmem:[#allocation2 + $0xe0] sm:$0xff] 0.0
      %117 = vst [vmem:[#allocation2 + $0xe8] sm:$0xff] 0.0
      %118 = vst [vmem:[#allocation2 + $0xf0] sm:$0xff] 0.0
      %119 = vst [vmem:[#allocation2 + $0xf8] sm:$0xff] 0.0
      %120 = vst [vmem:[#allocation2 + $0x100] sm:$0xff] 0.0
      %121 = vst [vmem:[#allocation2 + $0x108] sm:$0xff] 0.0
      %122 = vst [vmem:[#allocation2 + $0x110] sm:$0xff] 0.0
      %123 = vst [vmem:[#allocation2 + $0x118] sm:$0xff] 0.0
      %124 = vst [vmem:[#allocation2 + $0x120] sm:$0xff] 0.0
      %125 = vst [vmem:[#allocation2 + $0x128] sm:$0xff] 0.0
      %126 = vst [vmem:[#allocation2 + $0x130] sm:$0xff] 0.0
      %127 = vst [vmem:[#allocation2 + $0x138] sm:$0xff] 0.0
      %128 = vst [vmem:[#allocation2 + $0x140] sm:$0xff] 0.0
      %129 = vst [vmem:[#allocation2 + $0x148] sm:$0xff] 0.0
      %130 = vst [vmem:[#allocation2 + $0x150] sm:$0xff] 0.0
      %131 = vst [vmem:[#allocation2 + $0x158] sm:$0xff] 0.0
      %132 = vst [vmem:[#allocation2 + $0x160] sm:$0xff] 0.0
      %133 = vst [vmem:[#allocation2 + $0x168] sm:$0xff] 0.0
      %134 = vst [vmem:[#allocation2 + $0x170] sm:$0xff] 0.0
      %135 = vst [vmem:[#allocation2 + $0x178] sm:$0xff] 0.0
      %136 = vst [vmem:[#allocation2 + $0x180] sm:$0xff] 0.0
      %137 = vst [vmem:[#allocation2 + $0x188] sm:$0xff] 0.0
      %138 = vst [vmem:[#allocation2 + $0x190] sm:$0xff] 0.0
      %139 = vst [vmem:[#allocation2 + $0x198] sm:$0xff] 0.0
      %140 = vst [vmem:[#allocation2 + $0x1a0] sm:$0xff] 0.0
      %141 = vst [vmem:[#allocation2 + $0x1a8] sm:$0xff] 0.0
      %142 = vst [vmem:[#allocation2 + $0x1b0] sm:$0xff] 0.0
      %143 = vst [vmem:[#allocation2 + $0x1b8] sm:$0xff] 0.0
      %144 = vst [vmem:[#allocation2 + $0x1c0] sm:$0xff] 0.0
      %145 = vst [vmem:[#allocation2 + $0x1c8] sm:$0xff] 0.0
      %146 = vst [vmem:[#allocation2 + $0x1d0] sm:$0xff] 0.0
      %147 = vst [vmem:[#allocation2 + $0x1d8] sm:$0xff] 0.0
      %148 = vst [vmem:[#allocation2 + $0x1e0] sm:$0xff] 0.0
      %149 = vst [vmem:[#allocation2 + $0x1e8] sm:$0xff] 0.0
      %150 = vst [vmem:[#allocation2 + $0x1f0] sm:$0xff] 0.0
      %151 = vst [vmem:[#allocation2 + $0x1f8] sm:$0xff] 0.0
    $region33: #{tpu_custom_call.1} parent=1 // pred_fallthru
      _
    %s152 = sld [smem:[#allocation5]]
    %p153 = scmp.lt.s32.totalorder 0, %s152
    // Predicated region
    $region34: #{tpu_custom_call.1} parent=1 // pred_check
      %p154 = pneg %p153
    $region35: #{tpu_custom_call.1} parent=1 // pred_check_branch
      %156 = sbr.rel (%p154) target = $region37
    $region36: #{tpu_custom_call.1} parent=1 // pred_region
      %s157 = sadd.s32 0, 0
      %s158 = sld [smem:[#allocation4 + %s157]]
      %s159 = smul.u32 %s158, 512
      %s160 = sshra.s32 %s159, 3
      %s161 = sand.u32 %s159, 7
      %s162 = smul.addr %s160, 4
      %s163 = scalar_lea.vmem [#allocation9], %s162
      %v164 = vld [vmem:[%s163] sm:$0xf]
      %v165 = vld [vmem:[%s163 + $0x4] sm:$0xf]
      %v166 = vld [vmem:[%s163 + $0x8] sm:$0xf]
      %v167 = vld [vmem:[%s163 + $0xc] sm:$0xf]
      %v168 = vld [vmem:[%s163 + $0x10] sm:$0xf]
      %v169 = vld [vmem:[%s163 + $0x14] sm:$0xf]
      %v170 = vld [vmem:[%s163 + $0x18] sm:$0xf]
      %v171 = vld [vmem:[%s163 + $0x1c] sm:$0xf]
      %v172 = vld [vmem:[%s163 + $0x20] sm:$0xf]
      %v173 = vld [vmem:[%s163 + $0x24] sm:$0xf]
      %v174 = vld [vmem:[%s163 + $0x28] sm:$0xf]
      %v175 = vld [vmem:[%s163 + $0x2c] sm:$0xf]
      %v176 = vld [vmem:[%s163 + $0x30] sm:$0xf]
      %v177 = vld [vmem:[%s163 + $0x34] sm:$0xf]
      %v178 = vld [vmem:[%s163 + $0x38] sm:$0xf]
      %v179 = vld [vmem:[%s163 + $0x3c] sm:$0xf]
      %v180 = vld [vmem:[%s163 + $0x40] sm:$0xf]
      %v181 = vld [vmem:[%s163 + $0x44] sm:$0xf]
      %v182 = vld [vmem:[%s163 + $0x48] sm:$0xf]
      %v183 = vld [vmem:[%s163 + $0x4c] sm:$0xf]
      %v184 = vld [vmem:[%s163 + $0x50] sm:$0xf]
      %v185 = vld [vmem:[%s163 + $0x54] sm:$0xf]
      %v186 = vld [vmem:[%s163 + $0x58] sm:$0xf]
      %v187 = vld [vmem:[%s163 + $0x5c] sm:$0xf]
      %v188 = vld [vmem:[%s163 + $0x60] sm:$0xf]
      %v189 = vld [vmem:[%s163 + $0x64] sm:$0xf]
      %v190 = vld [vmem:[%s163 + $0x68] sm:$0xf]
      %v191 = vld [vmem:[%s163 + $0x6c] sm:$0xf]
      %v192 = vld [vmem:[%s163 + $0x70] sm:$0xf]
      %v193 = vld [vmem:[%s163 + $0x74] sm:$0xf]
      %v194 = vld [vmem:[%s163 + $0x78] sm:$0xf]
      %v195 = vld [vmem:[%s163 + $0x7c] sm:$0xf]
      %v196 = vld [vmem:[%s163 + $0x80] sm:$0xf]
      %v197 = vld [vmem:[%s163 + $0x84] sm:$0xf]
      %v198 = vld [vmem:[%s163 + $0x88] sm:$0xf]
      %v199 = vld [vmem:[%s163 + $0x8c] sm:$0xf]
      %v200 = vld [vmem:[%s163 + $0x90] sm:$0xf]
      %v201 = vld [vmem:[%s163 + $0x94] sm:$0xf]
      %v202 = vld [vmem:[%s163 + $0x98] sm:$0xf]
      %v203 = vld [vmem:[%s163 + $0x9c] sm:$0xf]
      %v204 = vld [vmem:[%s163 + $0xa0] sm:$0xf]
      %v205 = vld [vmem:[%s163 + $0xa4] sm:$0xf]
      %v206 = vld [vmem:[%s163 + $0xa8] sm:$0xf]
      %v207 = vld [vmem:[%s163 + $0xac] sm:$0xf]
      %v208 = vld [vmem:[%s163 + $0xb0] sm:$0xf]
      %v209 = vld [vmem:[%s163 + $0xb4] sm:$0xf]
      %v210 = vld [vmem:[%s163 + $0xb8] sm:$0xf]
      %v211 = vld [vmem:[%s163 + $0xbc] sm:$0xf]
      %v212 = vld [vmem:[%s163 + $0xc0] sm:$0xf]
      %v213 = vld [vmem:[%s163 + $0xc4] sm:$0xf]
      %v214 = vld [vmem:[%s163 + $0xc8] sm:$0xf]
      %v215 = vld [vmem:[%s163 + $0xcc] sm:$0xf]
      %v216 = vld [vmem:[%s163 + $0xd0] sm:$0xf]
      %v217 = vld [vmem:[%s163 + $0xd4] sm:$0xf]
      %v218 = vld [vmem:[%s163 + $0xd8] sm:$0xf]
      %v219 = vld [vmem:[%s163 + $0xdc] sm:$0xf]
      %v220 = vld [vmem:[%s163 + $0xe0] sm:$0xf]
      %v221 = vld [vmem:[%s163 + $0xe4] sm:$0xf]
      %v222 = vld [vmem:[%s163 + $0xe8] sm:$0xf]
      %v223 = vld [vmem:[%s163 + $0xec] sm:$0xf]
      %v224 = vld [vmem:[%s163 + $0xf0] sm:$0xf]
      %v225 = vld [vmem:[%s163 + $0xf4] sm:$0xf]
      %v226 = vld [vmem:[%s163 + $0xf8] sm:$0xf]
      %v227 = vld [vmem:[%s163 + $0xfc] sm:$0xf]
      %v228 = vld [vmem:[#allocation2] sm:$0xff]
      %v229 = vld [vmem:[#allocation2 + $0x8] sm:$0xff]
      %v230 = vld [vmem:[#allocation2 + $0x10] sm:$0xff]
      %v231 = vld [vmem:[#allocation2 + $0x18] sm:$0xff]
      %v232 = vld [vmem:[#allocation2 + $0x20] sm:$0xff]
      %v233 = vld [vmem:[#allocation2 + $0x28] sm:$0xff]
      %v234 = vld [vmem:[#allocation2 + $0x30] sm:$0xff]
      %v235 = vld [vmem:[#allocation2 + $0x38] sm:$0xff]
      %v236 = vld [vmem:[#allocation2 + $0x40] sm:$0xff]
      %v237 = vld [vmem:[#allocation2 + $0x48] sm:$0xff]
      %v238 = vld [vmem:[#allocation2 + $0x50] sm:$0xff]
      %v239 = vld [vmem:[#allocation2 + $0x58] sm:$0xff]
      %v240 = vld [vmem:[#allocation2 + $0x60] sm:$0xff]
      %v241 = vld [vmem:[#allocation2 + $0x68] sm:$0xff]
      %v242 = vld [vmem:[#allocation2 + $0x70] sm:$0xff]
      %v243 = vld [vmem:[#allocation2 + $0x78] sm:$0xff]
      %v244 = vld [vmem:[#allocation2 + $0x80] sm:$0xff]
      %v245 = vld [vmem:[#allocation2 + $0x88] sm:$0xff]
      %v246 = vld [vmem:[#allocation2 + $0x90] sm:$0xff]
      %v247 = vld [vmem:[#allocation2 + $0x98] sm:$0xff]
      %v248 = vld [vmem:[#allocation2 + $0xa0] sm:$0xff]
      %v249 = vld [vmem:[#allocation2 + $0xa8] sm:$0xff]
      %v250 = vld [vmem:[#allocation2 + $0xb0] sm:$0xff]
      %v251 = vld [vmem:[#allocation2 + $0xb8] sm:$0xff]
      %v252 = vld [vmem:[#allocation2 + $0xc0] sm:$0xff]
      %v253 = vld [vmem:[#allocation2 + $0xc8] sm:$0xff]
      %v254 = vld [vmem:[#allocation2 + $0xd0] sm:$0xff]
      %v255 = vld [vmem:[#allocation2 + $0xd8] sm:$0xff]
      %v256 = vld [vmem:[#allocation2 + $0xe0] sm:$0xff]
      %v257 = vld [vmem:[#allocation2 + $0xe8] sm:$0xff]
      %v258 = vld [vmem:[#allocation2 + $0xf0] sm:$0xff]
      %v259 = vld [vmem:[#allocation2 + $0xf8] sm:$0xff]
      %v260 = vld [vmem:[#allocation2 + $0x100] sm:$0xff]
      %v261 = vld [vmem:[#allocation2 + $0x108] sm:$0xff]
      %v262 = vld [vmem:[#allocation2 + $0x110] sm:$0xff]
      %v263 = vld [vmem:[#allocation2 + $0x118] sm:$0xff]
      %v264 = vld [vmem:[#allocation2 + $0x120] sm:$0xff]
      %v265 = vld [vmem:[#allocation2 + $0x128] sm:$0xff]
      %v266 = vld [vmem:[#allocation2 + $0x130] sm:$0xff]
      %v267 = vld [vmem:[#allocation2 + $0x138] sm:$0xff]
      %v268 = vld [vmem:[#allocation2 + $0x140] sm:$0xff]
      %v269 = vld [vmem:[#allocation2 + $0x148] sm:$0xff]
      %v270 = vld [vmem:[#allocation2 + $0x150] sm:$0xff]
      %v271 = vld [vmem:[#allocation2 + $0x158] sm:$0xff]
      %v272 = vld [vmem:[#allocation2 + $0x160] sm:$0xff]
      %v273 = vld [vmem:[#allocation2 + $0x168] sm:$0xff]
      %v274 = vld [vmem:[#allocation2 + $0x170] sm:$0xff]
      %v275 = vld [vmem:[#allocation2 + $0x178] sm:$0xff]
      %v276 = vld [vmem:[#allocation2 + $0x180] sm:$0xff]
      %v277 = vld [vmem:[#allocation2 + $0x188] sm:$0xff]
      %v278 = vld [vmem:[#allocation2 + $0x190] sm:$0xff]
      %v279 = vld [vmem:[#allocation2 + $0x198] sm:$0xff]
      %v280 = vld [vmem:[#allocation2 + $0x1a0] sm:$0xff]
      %v281 = vld [vmem:[#allocation2 + $0x1a8] sm:$0xff]
      %v282 = vld [vmem:[#allocation2 + $0x1b0] sm:$0xff]
      %v283 = vld [vmem:[#allocation2 + $0x1b8] sm:$0xff]
      %v284 = vld [vmem:[#allocation2 + $0x1c0] sm:$0xff]
      %v285 = vld [vmem:[#allocation2 + $0x1c8] sm:$0xff]
      %v286 = vld [vmem:[#allocation2 + $0x1d0] sm:$0xff]
      %v287 = vld [vmem:[#allocation2 + $0x1d8] sm:$0xff]
      %v288 = vld [vmem:[#allocation2 + $0x1e0] sm:$0xff]
      %v289 = vld [vmem:[#allocation2 + $0x1e8] sm:$0xff]
      %v290 = vld [vmem:[#allocation2 + $0x1f0] sm:$0xff]
      %v291 = vld [vmem:[#allocation2 + $0x1f8] sm:$0xff]
      %v292 = vld [vmem:[#allocation6] sm:$0xff]
      %v293 = vld [vmem:[#allocation6 + $0x8] sm:$0xff]
      %v294 = vld [vmem:[#allocation6 + $0x10] sm:$0xff]
      %v295 = vld [vmem:[#allocation6 + $0x18] sm:$0xff]
      %v296 = vld [vmem:[#allocation6 + $0x20] sm:$0xff]
      %v297 = vld [vmem:[#allocation6 + $0x28] sm:$0xff]
      %v298 = vld [vmem:[#allocation6 + $0x30] sm:$0xff]
      %v299 = vld [vmem:[#allocation6 + $0x38] sm:$0xff]
      %v300 = vld [vmem:[#allocation6 + $0x40] sm:$0xff]
      %v301 = vld [vmem:[#allocation6 + $0x48] sm:$0xff]
      %v302 = vld [vmem:[#allocation6 + $0x50] sm:$0xff]
      %v303 = vld [vmem:[#allocation6 + $0x58] sm:$0xff]
      %v304 = vld [vmem:[#allocation6 + $0x60] sm:$0xff]
      %v305 = vld [vmem:[#allocation6 + $0x68] sm:$0xff]
      %v306 = vld [vmem:[#allocation6 + $0x70] sm:$0xff]
      %v307 = vld [vmem:[#allocation6 + $0x78] sm:$0xff]
      %v308 = vld [vmem:[#allocation6 + $0x80] sm:$0xff]
      %v309 = vld [vmem:[#allocation6 + $0x88] sm:$0xff]
      %v310 = vld [vmem:[#allocation6 + $0x90] sm:$0xff]
      %v311 = vld [vmem:[#allocation6 + $0x98] sm:$0xff]
      %v312 = vld [vmem:[#allocation6 + $0xa0] sm:$0xff]
      %v313 = vld [vmem:[#allocation6 + $0xa8] sm:$0xff]
      %v314 = vld [vmem:[#allocation6 + $0xb0] sm:$0xff]
      %v315 = vld [vmem:[#allocation6 + $0xb8] sm:$0xff]
      %v316 = vld [vmem:[#allocation6 + $0xc0] sm:$0xff]
      %v317 = vld [vmem:[#allocation6 + $0xc8] sm:$0xff]
      %v318 = vld [vmem:[#allocation6 + $0xd0] sm:$0xff]
      %v319 = vld [vmem:[#allocation6 + $0xd8] sm:$0xff]
      %v320 = vld [vmem:[#allocation6 + $0xe0] sm:$0xff]
      %v321 = vld [vmem:[#allocation6 + $0xe8] sm:$0xff]
      %v322 = vld [vmem:[#allocation6 + $0xf0] sm:$0xff]
      %v323 = vld [vmem:[#allocation6 + $0xf8] sm:$0xff]
      %v324 = vld [vmem:[#allocation6 + $0x100] sm:$0xff]
      %v325 = vld [vmem:[#allocation6 + $0x108] sm:$0xff]
      %v326 = vld [vmem:[#allocation6 + $0x110] sm:$0xff]
      %v327 = vld [vmem:[#allocation6 + $0x118] sm:$0xff]
      %v328 = vld [vmem:[#allocation6 + $0x120] sm:$0xff]
      %v329 = vld [vmem:[#allocation6 + $0x128] sm:$0xff]
      %v330 = vld [vmem:[#allocation6 + $0x130] sm:$0xff]
      %v331 = vld [vmem:[#allocation6 + $0x138] sm:$0xff]
      %v332 = vld [vmem:[#allocation6 + $0x140] sm:$0xff]
      %v333 = vld [vmem:[#allocation6 + $0x148] sm:$0xff]
      %v334 = vld [vmem:[#allocation6 + $0x150] sm:$0xff]
      %v335 = vld [vmem:[#allocation6 + $0x158] sm:$0xff]
      %v336 = vld [vmem:[#allocation6 + $0x160] sm:$0xff]
      %v337 = vld [vmem:[#allocation6 + $0x168] sm:$0xff]
      %v338 = vld [vmem:[#allocation6 + $0x170] sm:$0xff]
      %v339 = vld [vmem:[#allocation6 + $0x178] sm:$0xff]
      %v340 = vld [vmem:[#allocation6 + $0x180] sm:$0xff]
      %v341 = vld [vmem:[#allocation6 + $0x188] sm:$0xff]
      %v342 = vld [vmem:[#allocation6 + $0x190] sm:$0xff]
      %v343 = vld [vmem:[#allocation6 + $0x198] sm:$0xff]
      %v344 = vld [vmem:[#allocation6 + $0x1a0] sm:$0xff]
      %v345 = vld [vmem:[#allocation6 + $0x1a8] sm:$0xff]
      %v346 = vld [vmem:[#allocation6 + $0x1b0] sm:$0xff]
      %v347 = vld [vmem:[#allocation6 + $0x1b8] sm:$0xff]
      %v348 = vld [vmem:[#allocation6 + $0x1c0] sm:$0xff]
      %v349 = vld [vmem:[#allocation6 + $0x1c8] sm:$0xff]
      %v350 = vld [vmem:[#allocation6 + $0x1d0] sm:$0xff]
      %v351 = vld [vmem:[#allocation6 + $0x1d8] sm:$0xff]
      %v352 = vld [vmem:[#allocation6 + $0x1e0] sm:$0xff]
      %v353 = vld [vmem:[#allocation6 + $0x1e8] sm:$0xff]
      %v354 = vld [vmem:[#allocation6 + $0x1f0] sm:$0xff]
      %v355 = vld [vmem:[#allocation6 + $0x1f8] sm:$0xff]
      %v356 = vld [vmem:[#allocation6 + $0x200] sm:$0xff]
      %v357 = vld [vmem:[#allocation6 + $0x208] sm:$0xff]
      %v358 = vld [vmem:[#allocation6 + $0x210] sm:$0xff]
      %v359 = vld [vmem:[#allocation6 + $0x218] sm:$0xff]
      %v360 = vld [vmem:[#allocation6 + $0x220] sm:$0xff]
      %v361 = vld [vmem:[#allocation6 + $0x228] sm:$0xff]
      %v362 = vld [vmem:[#allocation6 + $0x230] sm:$0xff]
      %v363 = vld [vmem:[#allocation6 + $0x238] sm:$0xff]
      %v364 = vld [vmem:[#allocation6 + $0x240] sm:$0xff]
      %v365 = vld [vmem:[#allocation6 + $0x248] sm:$0xff]
      %v366 = vld [vmem:[#allocation6 + $0x250] sm:$0xff]
      %v367 = vld [vmem:[#allocation6 + $0x258] sm:$0xff]
      %v368 = vld [vmem:[#allocation6 + $0x260] sm:$0xff]
      %v369 = vld [vmem:[#allocation6 + $0x268] sm:$0xff]
      %v370 = vld [vmem:[#allocation6 + $0x270] sm:$0xff]
      %v371 = vld [vmem:[#allocation6 + $0x278] sm:$0xff]
      %v372 = vld [vmem:[#allocation6 + $0x280] sm:$0xff]
      %v373 = vld [vmem:[#allocation6 + $0x288] sm:$0xff]
      %v374 = vld [vmem:[#allocation6 + $0x290] sm:$0xff]
      %v375 = vld [vmem:[#allocation6 + $0x298] sm:$0xff]
      %v376 = vld [vmem:[#allocation6 + $0x2a0] sm:$0xff]
      %v377 = vld [vmem:[#allocation6 + $0x2a8] sm:$0xff]
      %v378 = vld [vmem:[#allocation6 + $0x2b0] sm:$0xff]
      %v379 = vld [vmem:[#allocation6 + $0x2b8] sm:$0xff]
      %v380 = vld [vmem:[#allocation6 + $0x2c0] sm:$0xff]
      %v381 = vld [vmem:[#allocation6 + $0x2c8] sm:$0xff]
      %v382 = vld [vmem:[#allocation6 + $0x2d0] sm:$0xff]
      %v383 = vld [vmem:[#allocation6 + $0x2d8] sm:$0xff]
      %v384 = vld [vmem:[#allocation6 + $0x2e0] sm:$0xff]
      %v385 = vld [vmem:[#allocation6 + $0x2e8] sm:$0xff]
      %v386 = vld [vmem:[#allocation6 + $0x2f0] sm:$0xff]
      %v387 = vld [vmem:[#allocation6 + $0x2f8] sm:$0xff]
      %v388 = vld [vmem:[#allocation6 + $0x300] sm:$0xff]
      %v389 = vld [vmem:[#allocation6 + $0x308] sm:$0xff]
      %v390 = vld [vmem:[#allocation6 + $0x310] sm:$0xff]
      %v391 = vld [vmem:[#allocation6 + $0x318] sm:$0xff]
      %v392 = vld [vmem:[#allocation6 + $0x320] sm:$0xff]
      %v393 = vld [vmem:[#allocation6 + $0x328] sm:$0xff]
      %v394 = vld [vmem:[#allocation6 + $0x330] sm:$0xff]
      %v395 = vld [vmem:[#allocation6 + $0x338] sm:$0xff]
      %v396 = vld [vmem:[#allocation6 + $0x340] sm:$0xff]
      %v397 = vld [vmem:[#allocation6 + $0x348] sm:$0xff]
      %v398 = vld [vmem:[#allocation6 + $0x350] sm:$0xff]
      %v399 = vld [vmem:[#allocation6 + $0x358] sm:$0xff]
      %v400 = vld [vmem:[#allocation6 + $0x360] sm:$0xff]
      %v401 = vld [vmem:[#allocation6 + $0x368] sm:$0xff]
      %v402 = vld [vmem:[#allocation6 + $0x370] sm:$0xff]
      %v403 = vld [vmem:[#allocation6 + $0x378] sm:$0xff]
      %v404 = vld [vmem:[#allocation6 + $0x380] sm:$0xff]
      %v405 = vld [vmem:[#allocation6 + $0x388] sm:$0xff]
      %v406 = vld [vmem:[#allocation6 + $0x390] sm:$0xff]
      %v407 = vld [vmem:[#allocation6 + $0x398] sm:$0xff]
      %v408 = vld [vmem:[#allocation6 + $0x3a0] sm:$0xff]
      %v409 = vld [vmem:[#allocation6 + $0x3a8] sm:$0xff]
      %v410 = vld [vmem:[#allocation6 + $0x3b0] sm:$0xff]
      %v411 = vld [vmem:[#allocation6 + $0x3b8] sm:$0xff]
      %v412 = vld [vmem:[#allocation6 + $0x3c0] sm:$0xff]
      %v413 = vld [vmem:[#allocation6 + $0x3c8] sm:$0xff]
      %v414 = vld [vmem:[#allocation6 + $0x3d0] sm:$0xff]
      %v415 = vld [vmem:[#allocation6 + $0x3d8] sm:$0xff]
      %v416 = vld [vmem:[#allocation6 + $0x3e0] sm:$0xff]
      %v417 = vld [vmem:[#allocation6 + $0x3e8] sm:$0xff]
      %v418 = vld [vmem:[#allocation6 + $0x3f0] sm:$0xff]
      %v419 = vld [vmem:[#allocation6 + $0x3f8] sm:$0xff]
      %v548 = vunpack.c.l.b16 %v292
      %v549 = vunpack.c.h.b16 %v292
      %v550 = vunpack.c.l.b16 %v293
      %v551 = vunpack.c.h.b16 %v293
      %v552 = vunpack.c.l.b16 %v294
      %v553 = vunpack.c.h.b16 %v294
      %v554 = vunpack.c.l.b16 %v295
      %v555 = vunpack.c.h.b16 %v295
      %v556 = vunpack.c.l.b16 %v296
      %v557 = vunpack.c.h.b16 %v296
      %v558 = vunpack.c.l.b16 %v297
      %v559 = vunpack.c.h.b16 %v297
      %v560 = vunpack.c.l.b16 %v298
      %v561 = vunpack.c.h.b16 %v298
      %v562 = vunpack.c.l.b16 %v299
      %v563 = vunpack.c.h.b16 %v299
      %v564 = vunpack.c.l.b16 %v300
      %v565 = vunpack.c.h.b16 %v300
      %v566 = vunpack.c.l.b16 %v301
      %v567 = vunpack.c.h.b16 %v301
      %v568 = vunpack.c.l.b16 %v302
      %v569 = vunpack.c.h.b16 %v302
      %v570 = vunpack.c.l.b16 %v303
      %v571 = vunpack.c.h.b16 %v303
      %v572 = vunpack.c.l.b16 %v304
      %v573 = vunpack.c.h.b16 %v304
      %v574 = vunpack.c.l.b16 %v305
      %v575 = vunpack.c.h.b16 %v305
      %v576 = vunpack.c.l.b16 %v306
      %v577 = vunpack.c.h.b16 %v306
      %v578 = vunpack.c.l.b16 %v307
      %v579 = vunpack.c.h.b16 %v307
      %v580 = vunpack.c.l.b16 %v308
      %v581 = vunpack.c.h.b16 %v308
      %v582 = vunpack.c.l.b16 %v309
      %v583 = vunpack.c.h.b16 %v309
      %v584 = vunpack.c.l.b16 %v310
      %v585 = vunpack.c.h.b16 %v310
      %v586 = vunpack.c.l.b16 %v311
      %v587 = vunpack.c.h.b16 %v311
      %v588 = vunpack.c.l.b16 %v312
      %v589 = vunpack.c.h.b16 %v312
      %v590 = vunpack.c.l.b16 %v313
      %v591 = vunpack.c.h.b16 %v313
      %v592 = vunpack.c.l.b16 %v314
      %v593 = vunpack.c.h.b16 %v314
      %v594 = vunpack.c.l.b16 %v315
      %v595 = vunpack.c.h.b16 %v315
      %v596 = vunpack.c.l.b16 %v316
      %v597 = vunpack.c.h.b16 %v316
      %v598 = vunpack.c.l.b16 %v317
      %v599 = vunpack.c.h.b16 %v317
      %v600 = vunpack.c.l.b16 %v318
      %v601 = vunpack.c.h.b16 %v318
      %v602 = vunpack.c.l.b16 %v319
      %v603 = vunpack.c.h.b16 %v319
      %v604 = vunpack.c.l.b16 %v320
      %v605 = vunpack.c.h.b16 %v320
      %v606 = vunpack.c.l.b16 %v321
      %v607 = vunpack.c.h.b16 %v321
      %v608 = vunpack.c.l.b16 %v322
      %v609 = vunpack.c.h.b16 %v322
      %v610 = vunpack.c.l.b16 %v323
      %v611 = vunpack.c.h.b16 %v323
      %v612 = vunpack.c.l.b16 %v324
      %v613 = vunpack.c.h.b16 %v324
      %v614 = vunpack.c.l.b16 %v325
      %v615 = vunpack.c.h.b16 %v325
      %v616 = vunpack.c.l.b16 %v326
      %v617 = vunpack.c.h.b16 %v326
      %v618 = vunpack.c.l.b16 %v327
      %v619 = vunpack.c.h.b16 %v327
      %v620 = vunpack.c.l.b16 %v328
      %v621 = vunpack.c.h.b16 %v328
      %v622 = vunpack.c.l.b16 %v329
      %v623 = vunpack.c.h.b16 %v329
      %v624 = vunpack.c.l.b16 %v330
      %v625 = vunpack.c.h.b16 %v330
      %v626 = vunpack.c.l.b16 %v331
      %v627 = vunpack.c.h.b16 %v331
      %v628 = vunpack.c.l.b16 %v332
      %v629 = vunpack.c.h.b16 %v332
      %v630 = vunpack.c.l.b16 %v333
      %v631 = vunpack.c.h.b16 %v333
      %v632 = vunpack.c.l.b16 %v334
      %v633 = vunpack.c.h.b16 %v334
      %v634 = vunpack.c.l.b16 %v335
      %v635 = vunpack.c.h.b16 %v335
      %v636 = vunpack.c.l.b16 %v336
      %v637 = vunpack.c.h.b16 %v336
      %v638 = vunpack.c.l.b16 %v337
      %v639 = vunpack.c.h.b16 %v337
      %v640 = vunpack.c.l.b16 %v338
      %v641 = vunpack.c.h.b16 %v338
      %v642 = vunpack.c.l.b16 %v339
      %v643 = vunpack.c.h.b16 %v339
      %v644 = vunpack.c.l.b16 %v340
      %v645 = vunpack.c.h.b16 %v340
      %v646 = vunpack.c.l.b16 %v341
      %v647 = vunpack.c.h.b16 %v341
      %v648 = vunpack.c.l.b16 %v342
      %v649 = vunpack.c.h.b16 %v342
      %v650 = vunpack.c.l.b16 %v343
      %v651 = vunpack.c.h.b16 %v343
      %v652 = vunpack.c.l.b16 %v344
      %v653 = vunpack.c.h.b16 %v344
      %v654 = vunpack.c.l.b16 %v345
      %v655 = vunpack.c.h.b16 %v345
      %v656 = vunpack.c.l.b16 %v346
      %v657 = vunpack.c.h.b16 %v346
      %v658 = vunpack.c.l.b16 %v347
      %v659 = vunpack.c.h.b16 %v347
      %v660 = vunpack.c.l.b16 %v348
      %v661 = vunpack.c.h.b16 %v348
      %v662 = vunpack.c.l.b16 %v349
      %v663 = vunpack.c.h.b16 %v349
      %v664 = vunpack.c.l.b16 %v350
      %v665 = vunpack.c.h.b16 %v350
      %v666 = vunpack.c.l.b16 %v351
      %v667 = vunpack.c.h.b16 %v351
      %v668 = vunpack.c.l.b16 %v352
      %v669 = vunpack.c.h.b16 %v352
      %v670 = vunpack.c.l.b16 %v353
      %v671 = vunpack.c.h.b16 %v353
      %v672 = vunpack.c.l.b16 %v354
      %v673 = vunpack.c.h.b16 %v354
      %v674 = vunpack.c.l.b16 %v355
      %v675 = vunpack.c.h.b16 %v355
      %v676 = vunpack.c.l.b16 %v356
      %v677 = vunpack.c.h.b16 %v356
      %v678 = vunpack.c.l.b16 %v357
      %v679 = vunpack.c.h.b16 %v357
      %v680 = vunpack.c.l.b16 %v358
      %v681 = vunpack.c.h.b16 %v358
      %v682 = vunpack.c.l.b16 %v359
      %v683 = vunpack.c.h.b16 %v359
      %v684 = vunpack.c.l.b16 %v360
      %v685 = vunpack.c.h.b16 %v360
      %v686 = vunpack.c.l.b16 %v361
      %v687 = vunpack.c.h.b16 %v361
      %v688 = vunpack.c.l.b16 %v362
      %v689 = vunpack.c.h.b16 %v362
      %v690 = vunpack.c.l.b16 %v363
      %v691 = vunpack.c.h.b16 %v363
      %v692 = vunpack.c.l.b16 %v364
      %v693 = vunpack.c.h.b16 %v364
      %v694 = vunpack.c.l.b16 %v365
      %v695 = vunpack.c.h.b16 %v365
      %v696 = vunpack.c.l.b16 %v366
      %v697 = vunpack.c.h.b16 %v366
      %v698 = vunpack.c.l.b16 %v367
      %v699 = vunpack.c.h.b16 %v367
      %v700 = vunpack.c.l.b16 %v368
      %v701 = vunpack.c.h.b16 %v368
      %v702 = vunpack.c.l.b16 %v369
      %v703 = vunpack.c.h.b16 %v369
      %v704 = vunpack.c.l.b16 %v370
      %v705 = vunpack.c.h.b16 %v370
      %v706 = vunpack.c.l.b16 %v371
      %v707 = vunpack.c.h.b16 %v371
      %v708 = vunpack.c.l.b16 %v372
      %v709 = vunpack.c.h.b16 %v372
      %v710 = vunpack.c.l.b16 %v373
      %v711 = vunpack.c.h.b16 %v373
      %v712 = vunpack.c.l.b16 %v374
      %v713 = vunpack.c.h.b16 %v374
      %v714 = vunpack.c.l.b16 %v375
      %v715 = vunpack.c.h.b16 %v375
      %v716 = vunpack.c.l.b16 %v376
      %v717 = vunpack.c.h.b16 %v376
      %v718 = vunpack.c.l.b16 %v377
      %v719 = vunpack.c.h.b16 %v377
      %v720 = vunpack.c.l.b16 %v378
      %v721 = vunpack.c.h.b16 %v378
      %v722 = vunpack.c.l.b16 %v379
      %v723 = vunpack.c.h.b16 %v379
      %v724 = vunpack.c.l.b16 %v380
      %v725 = vunpack.c.h.b16 %v380
      %v726 = vunpack.c.l.b16 %v381
      %v727 = vunpack.c.h.b16 %v381
      %v728 = vunpack.c.l.b16 %v382
      %v729 = vunpack.c.h.b16 %v382
      %v730 = vunpack.c.l.b16 %v383
      %v731 = vunpack.c.h.b16 %v383
      %v732 = vunpack.c.l.b16 %v384
      %v733 = vunpack.c.h.b16 %v384
      %v734 = vunpack.c.l.b16 %v385
      %v735 = vunpack.c.h.b16 %v385
      %v736 = vunpack.c.l.b16 %v386
      %v737 = vunpack.c.h.b16 %v386
      %v738 = vunpack.c.l.b16 %v387
      %v739 = vunpack.c.h.b16 %v387
      %v740 = vunpack.c.l.b16 %v388
      %v741 = vunpack.c.h.b16 %v388
      %v742 = vunpack.c.l.b16 %v389
      %v743 = vunpack.c.h.b16 %v389
      %v744 = vunpack.c.l.b16 %v390
      %v745 = vunpack.c.h.b16 %v390
      %v746 = vunpack.c.l.b16 %v391
      %v747 = vunpack.c.h.b16 %v391
      %v748 = vunpack.c.l.b16 %v392
      %v749 = vunpack.c.h.b16 %v392
      %v750 = vunpack.c.l.b16 %v393
      %v751 = vunpack.c.h.b16 %v393
      %v752 = vunpack.c.l.b16 %v394
      %v753 = vunpack.c.h.b16 %v394
      %v754 = vunpack.c.l.b16 %v395
      %v755 = vunpack.c.h.b16 %v395
      %v756 = vunpack.c.l.b16 %v396
      %v757 = vunpack.c.h.b16 %v396
      %v758 = vunpack.c.l.b16 %v397
      %v759 = vunpack.c.h.b16 %v397
      %v760 = vunpack.c.l.b16 %v398
      %v761 = vunpack.c.h.b16 %v398
      %v762 = vunpack.c.l.b16 %v399
      %v763 = vunpack.c.h.b16 %v399
      %v764 = vunpack.c.l.b16 %v400
      %v765 = vunpack.c.h.b16 %v400
      %v766 = vunpack.c.l.b16 %v401
      %v767 = vunpack.c.h.b16 %v401
      %v768 = vunpack.c.l.b16 %v402
      %v769 = vunpack.c.h.b16 %v402
      %v770 = vunpack.c.l.b16 %v403
      %v771 = vunpack.c.h.b16 %v403
      %v772 = vunpack.c.l.b16 %v404
      %v773 = vunpack.c.h.b16 %v404
      %v774 = vunpack.c.l.b16 %v405
      %v775 = vunpack.c.h.b16 %v405
      %v776 = vunpack.c.l.b16 %v406
      %v777 = vunpack.c.h.b16 %v406
      %v778 = vunpack.c.l.b16 %v407
      %v779 = vunpack.c.h.b16 %v407
      %v780 = vunpack.c.l.b16 %v408
      %v781 = vunpack.c.h.b16 %v408
      %v782 = vunpack.c.l.b16 %v409
      %v783 = vunpack.c.h.b16 %v409
      %v784 = vunpack.c.l.b16 %v410
      %v785 = vunpack.c.h.b16 %v410
      %v786 = vunpack.c.l.b16 %v411
      %v787 = vunpack.c.h.b16 %v411
      %v788 = vunpack.c.l.b16 %v412
      %v789 = vunpack.c.h.b16 %v412
      %v790 = vunpack.c.l.b16 %v413
      %v791 = vunpack.c.h.b16 %v413
      %v792 = vunpack.c.l.b16 %v414
      %v793 = vunpack.c.h.b16 %v414
      %v794 = vunpack.c.l.b16 %v415
      %v795 = vunpack.c.h.b16 %v415
      %v796 = vunpack.c.l.b16 %v416
      %v797 = vunpack.c.h.b16 %v416
      %v798 = vunpack.c.l.b16 %v417
      %v799 = vunpack.c.h.b16 %v417
      %v800 = vunpack.c.l.b16 %v418
      %v801 = vunpack.c.h.b16 %v418
      %v802 = vunpack.c.l.b16 %v419
      %v803 = vunpack.c.h.b16 %v419
      %v804 = vpack.c.b16 %v552, %v548
      %v805 = vpack.c.b16 %v553, %v549
      %v806 = vpack.c.b16 %v554, %v550
      %v807 = vpack.c.b16 %v555, %v551
      %v808 = vpack.c.b16 %v560, %v556
      %v809 = vpack.c.b16 %v561, %v557
      %v810 = vpack.c.b16 %v562, %v558
      %v811 = vpack.c.b16 %v563, %v559
      %v812 = vpack.c.b16 %v568, %v564
      %v813 = vpack.c.b16 %v569, %v565
      %v814 = vpack.c.b16 %v570, %v566
      %v815 = vpack.c.b16 %v571, %v567
      %v816 = vpack.c.b16 %v576, %v572
      %v817 = vpack.c.b16 %v577, %v573
      %v818 = vpack.c.b16 %v578, %v574
      %v819 = vpack.c.b16 %v579, %v575
      %v820 = vpack.c.b16 %v584, %v580
      %v821 = vpack.c.b16 %v585, %v581
      %v822 = vpack.c.b16 %v586, %v582
      %v823 = vpack.c.b16 %v587, %v583
      %v824 = vpack.c.b16 %v592, %v588
      %v825 = vpack.c.b16 %v593, %v589
      %v826 = vpack.c.b16 %v594, %v590
      %v827 = vpack.c.b16 %v595, %v591
      %v828 = vpack.c.b16 %v600, %v596
      %v829 = vpack.c.b16 %v601, %v597
      %v830 = vpack.c.b16 %v602, %v598
      %v831 = vpack.c.b16 %v603, %v599
      %v832 = vpack.c.b16 %v608, %v604
      %v833 = vpack.c.b16 %v609, %v605
      %v834 = vpack.c.b16 %v610, %v606
      %v835 = vpack.c.b16 %v611, %v607
      %v836 = vpack.c.b16 %v616, %v612
      %v837 = vpack.c.b16 %v617, %v613
      %v838 = vpack.c.b16 %v618, %v614
      %v839 = vpack.c.b16 %v619, %v615
      %v840 = vpack.c.b16 %v624, %v620
      %v841 = vpack.c.b16 %v625, %v621
      %v842 = vpack.c.b16 %v626, %v622
      %v843 = vpack.c.b16 %v627, %v623
      %v844 = vpack.c.b16 %v632, %v628
      %v845 = vpack.c.b16 %v633, %v629
      %v846 = vpack.c.b16 %v634, %v630
      %v847 = vpack.c.b16 %v635, %v631
      %v848 = vpack.c.b16 %v640, %v636
      %v849 = vpack.c.b16 %v641, %v637
      %v850 = vpack.c.b16 %v642, %v638
      %v851 = vpack.c.b16 %v643, %v639
      %v852 = vpack.c.b16 %v648, %v644
      %v853 = vpack.c.b16 %v649, %v645
      %v854 = vpack.c.b16 %v650, %v646
      %v855 = vpack.c.b16 %v651, %v647
      %v856 = vpack.c.b16 %v656, %v652
      %v857 = vpack.c.b16 %v657, %v653
      %v858 = vpack.c.b16 %v658, %v654
      %v859 = vpack.c.b16 %v659, %v655
      %v860 = vpack.c.b16 %v664, %v660
      %v861 = vpack.c.b16 %v665, %v661
      %v862 = vpack.c.b16 %v666, %v662
      %v863 = vpack.c.b16 %v667, %v663
      %v864 = vpack.c.b16 %v672, %v668
      %v865 = vpack.c.b16 %v673, %v669
      %v866 = vpack.c.b16 %v674, %v670
      %v867 = vpack.c.b16 %v675, %v671
      %v868 = vpack.c.b16 %v680, %v676
      %v869 = vpack.c.b16 %v681, %v677
      %v870 = vpack.c.b16 %v682, %v678
      %v871 = vpack.c.b16 %v683, %v679
      %v872 = vpack.c.b16 %v688, %v684
      %v873 = vpack.c.b16 %v689, %v685
      %v874 = vpack.c.b16 %v690, %v686
      %v875 = vpack.c.b16 %v691, %v687
      %v876 = vpack.c.b16 %v696, %v692
      %v877 = vpack.c.b16 %v697, %v693
      %v878 = vpack.c.b16 %v698, %v694
      %v879 = vpack.c.b16 %v699, %v695
      %v880 = vpack.c.b16 %v704, %v700
      %v881 = vpack.c.b16 %v705, %v701
      %v882 = vpack.c.b16 %v706, %v702
      %v883 = vpack.c.b16 %v707, %v703
      %v884 = vpack.c.b16 %v712, %v708
      %v885 = vpack.c.b16 %v713, %v709
      %v886 = vpack.c.b16 %v714, %v710
      %v887 = vpack.c.b16 %v715, %v711
      %v888 = vpack.c.b16 %v720, %v716
      %v889 = vpack.c.b16 %v721, %v717
      %v890 = vpack.c.b16 %v722, %v718
      %v891 = vpack.c.b16 %v723, %v719
      %v892 = vpack.c.b16 %v728, %v724
      %v893 = vpack.c.b16 %v729, %v725
      %v894 = vpack.c.b16 %v730, %v726
      %v895 = vpack.c.b16 %v731, %v727
      %v896 = vpack.c.b16 %v736, %v732
      %v897 = vpack.c.b16 %v737, %v733
      %v898 = vpack.c.b16 %v738, %v734
      %v899 = vpack.c.b16 %v739, %v735
      %v900 = vpack.c.b16 %v744, %v740
      %v901 = vpack.c.b16 %v745, %v741
      %v902 = vpack.c.b16 %v746, %v742
      %v903 = vpack.c.b16 %v747, %v743
      %v904 = vpack.c.b16 %v752, %v748
      %v905 = vpack.c.b16 %v753, %v749
      %v906 = vpack.c.b16 %v754, %v750
      %v907 = vpack.c.b16 %v755, %v751
      %v908 = vpack.c.b16 %v760, %v756
      %v909 = vpack.c.b16 %v761, %v757
      %v910 = vpack.c.b16 %v762, %v758
      %v911 = vpack.c.b16 %v763, %v759
      %v912 = vpack.c.b16 %v768, %v764
      %v913 = vpack.c.b16 %v769, %v765
      %v914 = vpack.c.b16 %v770, %v766
      %v915 = vpack.c.b16 %v771, %v767
      %v916 = vpack.c.b16 %v776, %v772
      %v917 = vpack.c.b16 %v777, %v773
      %v918 = vpack.c.b16 %v778, %v774
      %v919 = vpack.c.b16 %v779, %v775
      %v920 = vpack.c.b16 %v784, %v780
      %v921 = vpack.c.b16 %v785, %v781
      %v922 = vpack.c.b16 %v786, %v782
      %v923 = vpack.c.b16 %v787, %v783
      %v924 = vpack.c.b16 %v792, %v788
      %v925 = vpack.c.b16 %v793, %v789
      %v926 = vpack.c.b16 %v794, %v790
      %v927 = vpack.c.b16 %v795, %v791
      %v928 = vpack.c.b16 %v800, %v796
      %v929 = vpack.c.b16 %v801, %v797
      %v930 = vpack.c.b16 %v802, %v798
      %v931 = vpack.c.b16 %v803, %v799
      %v1124 = vunpack.c.l.b16 %v164
      %v1125 = vunpack.c.l.b16 %v165
      %v1126 = vunpack.c.l.b16 %v166
      %v1127 = vunpack.c.l.b16 %v167
      %v1128 = vunpack.c.l.b16 %v168
      %v1129 = vunpack.c.l.b16 %v169
      %v1130 = vunpack.c.l.b16 %v170
      %v1131 = vunpack.c.l.b16 %v171
      %v1132 = vunpack.c.l.b16 %v172
      %v1133 = vunpack.c.l.b16 %v173
      %v1134 = vunpack.c.l.b16 %v174
      %v1135 = vunpack.c.l.b16 %v175
      %v1136 = vunpack.c.l.b16 %v176
      %v1137 = vunpack.c.l.b16 %v177
      %v1138 = vunpack.c.l.b16 %v178
      %v1139 = vunpack.c.l.b16 %v179
      %v1140 = vunpack.c.l.b16 %v180
      %v1141 = vunpack.c.l.b16 %v181
      %v1142 = vunpack.c.l.b16 %v182
      %v1143 = vunpack.c.l.b16 %v183
      %v1144 = vunpack.c.l.b16 %v184
      %v1145 = vunpack.c.l.b16 %v185
      %v1146 = vunpack.c.l.b16 %v186
      %v1147 = vunpack.c.l.b16 %v187
      %v1148 = vunpack.c.l.b16 %v188
      %v1149 = vunpack.c.l.b16 %v189
      %v1150 = vunpack.c.l.b16 %v190
      %v1151 = vunpack.c.l.b16 %v191
      %v1152 = vunpack.c.l.b16 %v192
      %v1153 = vunpack.c.l.b16 %v193
      %v1154 = vunpack.c.l.b16 %v194
      %v1155 = vunpack.c.l.b16 %v195
      %v1156 = vunpack.c.l.b16 %v196
      %v1157 = vunpack.c.l.b16 %v197
      %v1158 = vunpack.c.l.b16 %v198
      %v1159 = vunpack.c.l.b16 %v199
      %v1160 = vunpack.c.l.b16 %v200
      %v1161 = vunpack.c.l.b16 %v201
      %v1162 = vunpack.c.l.b16 %v202
      %v1163 = vunpack.c.l.b16 %v203
      %v1164 = vunpack.c.l.b16 %v204
      %v1165 = vunpack.c.l.b16 %v205
      %v1166 = vunpack.c.l.b16 %v206
      %v1167 = vunpack.c.l.b16 %v207
      %v1168 = vunpack.c.l.b16 %v208
      %v1169 = vunpack.c.l.b16 %v209
      %v1170 = vunpack.c.l.b16 %v210
      %v1171 = vunpack.c.l.b16 %v211
      %v1172 = vunpack.c.l.b16 %v212
      %v1173 = vunpack.c.l.b16 %v213
      %v1174 = vunpack.c.l.b16 %v214
      %v1175 = vunpack.c.l.b16 %v215
      %v1176 = vunpack.c.l.b16 %v216
      %v1177 = vunpack.c.l.b16 %v217
      %v1178 = vunpack.c.l.b16 %v218
      %v1179 = vunpack.c.l.b16 %v219
      %v1180 = vunpack.c.l.b16 %v220
      %v1181 = vunpack.c.l.b16 %v221
      %v1182 = vunpack.c.l.b16 %v222
      %v1183 = vunpack.c.l.b16 %v223
      %v1184 = vunpack.c.l.b16 %v224
      %v1185 = vunpack.c.l.b16 %v225
      %v1186 = vunpack.c.l.b16 %v226
      %v1187 = vunpack.c.l.b16 %v227
      %v1188 = vpack.c.b16 %v1125, %v1124
      %v1189 = vpack.c.b16 %v1127, %v1126
      %v1190 = vpack.c.b16 %v1129, %v1128
      %v1191 = vpack.c.b16 %v1131, %v1130
      %v1192 = vpack.c.b16 %v1133, %v1132
      %v1193 = vpack.c.b16 %v1135, %v1134
      %v1194 = vpack.c.b16 %v1137, %v1136
      %v1195 = vpack.c.b16 %v1139, %v1138
      %v1196 = vpack.c.b16 %v1141, %v1140
      %v1197 = vpack.c.b16 %v1143, %v1142
      %v1198 = vpack.c.b16 %v1145, %v1144
      %v1199 = vpack.c.b16 %v1147, %v1146
      %v1200 = vpack.c.b16 %v1149, %v1148
      %v1201 = vpack.c.b16 %v1151, %v1150
      %v1202 = vpack.c.b16 %v1153, %v1152
      %v1203 = vpack.c.b16 %v1155, %v1154
      %v1204 = vpack.c.b16 %v1157, %v1156
      %v1205 = vpack.c.b16 %v1159, %v1158
      %v1206 = vpack.c.b16 %v1161, %v1160
      %v1207 = vpack.c.b16 %v1163, %v1162
      %v1208 = vpack.c.b16 %v1165, %v1164
      %v1209 = vpack.c.b16 %v1167, %v1166
      %v1210 = vpack.c.b16 %v1169, %v1168
      %v1211 = vpack.c.b16 %v1171, %v1170
      %v1212 = vpack.c.b16 %v1173, %v1172
      %v1213 = vpack.c.b16 %v1175, %v1174
      %v1214 = vpack.c.b16 %v1177, %v1176
      %v1215 = vpack.c.b16 %v1179, %v1178
      %v1216 = vpack.c.b16 %v1181, %v1180
      %v1217 = vpack.c.b16 %v1183, %v1182
      %v1218 = vpack.c.b16 %v1185, %v1184
      %v1219 = vpack.c.b16 %v1187, %v1186
      %1252 = vmatprep.subr.bf16.mxu0 0
      %1253 = vmatpush1.bf16.msra.mxu0 %v1195
      %1254 = vmatprep.subr.bf16.mxu0 0
      %1255 = vmatpush1.bf16.msra.mxu0 %v1194
      %1256 = vmatprep.subr.bf16.mxu0 0
      %1257 = vmatpush1.bf16.msra.mxu0 %v1193
      %1258 = vmatprep.subr.bf16.mxu0 0
      %1259 = vmatpush1.bf16.msra.mxu0 %v1192
      %1260 = vmatprep.subr.bf16.mxu0 0
      %1261 = vmatpush1.bf16.msra.mxu0 %v1191
      %1262 = vmatprep.subr.bf16.mxu0 0
      %1263 = vmatpush1.bf16.msra.mxu0 %v1190
      %1264 = vmatprep.subr.bf16.mxu0 0
      %1265 = vmatpush1.bf16.msra.mxu0 %v1189
      %1266 = vmatprep.subr.bf16.mxu0 0
      %1267 = vmatpush1.bf16.msra.mxu0 %v1188
      %1268 = vmatprep.subr.bf16.mxu0 0
      %1269 = vmatpush2.bf16.msra.mxu0 %v1203
      %1270 = vmatprep.subr.bf16.mxu0 0
      %1271 = vmatpush2.bf16.msra.mxu0 %v1202
      %1272 = vmatprep.subr.bf16.mxu0 0
      %1273 = vmatpush2.bf16.msra.mxu0 %v1201
      %1274 = vmatprep.subr.bf16.mxu0 0
      %1275 = vmatpush2.bf16.msra.mxu0 %v1200
      %1276 = vmatprep.subr.bf16.mxu0 0
      %1277 = vmatpush2.bf16.msra.mxu0 %v1199
      %1278 = vmatprep.subr.bf16.mxu0 0
      %1279 = vmatpush2.bf16.msra.mxu0 %v1198
      %1280 = vmatprep.subr.bf16.mxu0 0
      %1281 = vmatpush2.bf16.msra.mxu0 %v1197
      %1282 = vmatprep.subr.bf16.mxu0 0
      %1283 = vmatpush2.bf16.msra.mxu0 %v1196
      %1284 = vmatprep.mubr.bf16.mxu0 %v805
      %1285 = vmatmul.mubr.bf16.gmra.mxu0 %v804
      %v1286 = vpop.f32.mrf.mxu0
      %v1287 = vadd.f32 0.0, %v1286
      %v1288 = vpop.f32.mrf.mxu0
      %v1289 = vpop.f32.mrf.mxu0
      %v1290 = vadd.f32 0.0, %v1289
      %v1291 = vpop.f32.mrf.mxu0
      %1292 = vmatprep.mubr.bf16.mxu0 %v809
      %1293 = vmatmul.mubr.bf16.gmra.mxu0 %v808
      %v1294 = vpop.f32.mrf.mxu0
      %v1295 = vadd.f32 0.0, %v1294
      %v1296 = vpop.f32.mrf.mxu0
      %v1297 = vpop.f32.mrf.mxu0
      %v1298 = vadd.f32 0.0, %v1297
      %v1299 = vpop.f32.mrf.mxu0
      %1300 = vmatprep.mubr.bf16.mxu0 %v813
      %1301 = vmatmul.mubr.bf16.gmra.mxu0 %v812
      %v1302 = vpop.f32.mrf.mxu0
      %v1303 = vadd.f32 0.0, %v1302
      %v1304 = vpop.f32.mrf.mxu0
      %v1305 = vpop.f32.mrf.mxu0
      %v1306 = vadd.f32 0.0, %v1305
      %v1307 = vpop.f32.mrf.mxu0
      %1308 = vmatprep.mubr.bf16.mxu0 %v817
      %1309 = vmatmul.mubr.bf16.gmra.mxu0 %v816
      %v1310 = vpop.f32.mrf.mxu0
      %v1311 = vadd.f32 0.0, %v1310
      %v1312 = vpop.f32.mrf.mxu0
      %v1313 = vpop.f32.mrf.mxu0
      %v1314 = vadd.f32 0.0, %v1313
      %v1315 = vpop.f32.mrf.mxu0
      %1316 = vmatprep.mubr.bf16.mxu0 %v821
      %1317 = vmatmul.mubr.bf16.gmra.mxu0 %v820
      %v1318 = vpop.f32.mrf.mxu0
      %v1319 = vadd.f32 0.0, %v1318
      %v1320 = vpop.f32.mrf.mxu0
      %v1321 = vpop.f32.mrf.mxu0
      %v1322 = vadd.f32 0.0, %v1321
      %v1323 = vpop.f32.mrf.mxu0
      %1324 = vmatprep.mubr.bf16.mxu0 %v825
      %1325 = vmatmul.mubr.bf16.gmra.mxu0 %v824
      %v1326 = vpop.f32.mrf.mxu0
      %v1327 = vadd.f32 0.0, %v1326
      %v1328 = vpop.f32.mrf.mxu0
      %v1329 = vpop.f32.mrf.mxu0
      %v1330 = vadd.f32 0.0, %v1329
      %v1331 = vpop.f32.mrf.mxu0
      %1332 = vmatprep.mubr.bf16.mxu0 %v829
      %1333 = vmatmul.mubr.bf16.gmra.mxu0 %v828
      %v1334 = vpop.f32.mrf.mxu0
      %v1335 = vadd.f32 0.0, %v1334
      %v1336 = vpop.f32.mrf.mxu0
      %v1337 = vpop.f32.mrf.mxu0
      %v1338 = vadd.f32 0.0, %v1337
      %v1339 = vpop.f32.mrf.mxu0
      %1340 = vmatprep.mubr.bf16.mxu0 %v833
      %1341 = vmatmul.mubr.bf16.gmra.mxu0 %v832
      %v1342 = vpop.f32.mrf.mxu0
      %v1343 = vadd.f32 0.0, %v1342
      %v1344 = vpop.f32.mrf.mxu0
      %v1345 = vpop.f32.mrf.mxu0
      %v1346 = vadd.f32 0.0, %v1345
      %v1347 = vpop.f32.mrf.mxu0
      %1348 = vmatprep.mubr.bf16.mxu0 %v837
      %1349 = vmatmul.mubr.bf16.gmra.mxu0 %v836
      %v1350 = vpop.f32.mrf.mxu0
      %v1351 = vadd.f32 0.0, %v1350
      %v1352 = vpop.f32.mrf.mxu0
      %v1353 = vpop.f32.mrf.mxu0
      %v1354 = vadd.f32 0.0, %v1353
      %v1355 = vpop.f32.mrf.mxu0
      %1356 = vmatprep.mubr.bf16.mxu0 %v841
      %1357 = vmatmul.mubr.bf16.gmra.mxu0 %v840
      %v1358 = vpop.f32.mrf.mxu0
      %v1359 = vadd.f32 0.0, %v1358
      %v1360 = vpop.f32.mrf.mxu0
      %v1361 = vpop.f32.mrf.mxu0
      %v1362 = vadd.f32 0.0, %v1361
      %v1363 = vpop.f32.mrf.mxu0
      %1364 = vmatprep.mubr.bf16.mxu0 %v845
      %1365 = vmatmul.mubr.bf16.gmra.mxu0 %v844
      %v1366 = vpop.f32.mrf.mxu0
      %v1367 = vadd.f32 0.0, %v1366
      %v1368 = vpop.f32.mrf.mxu0
      %v1369 = vpop.f32.mrf.mxu0
      %v1370 = vadd.f32 0.0, %v1369
      %v1371 = vpop.f32.mrf.mxu0
      %1372 = vmatprep.mubr.bf16.mxu0 %v849
      %1373 = vmatmul.mubr.bf16.gmra.mxu0 %v848
      %v1374 = vpop.f32.mrf.mxu0
      %v1375 = vadd.f32 0.0, %v1374
      %v1376 = vpop.f32.mrf.mxu0
      %v1377 = vpop.f32.mrf.mxu0
      %v1378 = vadd.f32 0.0, %v1377
      %v1379 = vpop.f32.mrf.mxu0
      %1380 = vmatprep.mubr.bf16.mxu0 %v853
      %1381 = vmatmul.mubr.bf16.gmra.mxu0 %v852
      %v1382 = vpop.f32.mrf.mxu0
      %v1383 = vadd.f32 0.0, %v1382
      %v1384 = vpop.f32.mrf.mxu0
      %v1385 = vpop.f32.mrf.mxu0
      %v1386 = vadd.f32 0.0, %v1385
      %v1387 = vpop.f32.mrf.mxu0
      %1388 = vmatprep.mubr.bf16.mxu0 %v857
      %1389 = vmatmul.mubr.bf16.gmra.mxu0 %v856
      %v1390 = vpop.f32.mrf.mxu0
      %v1391 = vadd.f32 0.0, %v1390
      %v1392 = vpop.f32.mrf.mxu0
      %v1393 = vpop.f32.mrf.mxu0
      %v1394 = vadd.f32 0.0, %v1393
      %v1395 = vpop.f32.mrf.mxu0
      %1396 = vmatprep.mubr.bf16.mxu0 %v861
      %1397 = vmatmul.mubr.bf16.gmra.mxu0 %v860
      %v1398 = vpop.f32.mrf.mxu0
      %v1399 = vadd.f32 0.0, %v1398
      %v1400 = vpop.f32.mrf.mxu0
      %v1401 = vpop.f32.mrf.mxu0
      %v1402 = vadd.f32 0.0, %v1401
      %v1403 = vpop.f32.mrf.mxu0
      %1404 = vmatprep.mubr.bf16.mxu0 %v865
      %1405 = vmatmul.mubr.bf16.gmra.mxu0 %v864
      %v1406 = vpop.f32.mrf.mxu0
      %v1407 = vadd.f32 0.0, %v1406
      %v1408 = vpop.f32.mrf.mxu0
      %v1409 = vpop.f32.mrf.mxu0
      %v1410 = vadd.f32 0.0, %v1409
      %v1411 = vpop.f32.mrf.mxu0
      %1412 = vmatprep.mubr.bf16.mxu0 %v869
      %1413 = vmatmul.mubr.bf16.gmra.mxu0 %v868
      %v1414 = vpop.f32.mrf.mxu0
      %v1415 = vadd.f32 0.0, %v1414
      %v1416 = vpop.f32.mrf.mxu0
      %v1417 = vpop.f32.mrf.mxu0
      %v1418 = vadd.f32 0.0, %v1417
      %v1419 = vpop.f32.mrf.mxu0
      %1420 = vmatprep.mubr.bf16.mxu0 %v873
      %1421 = vmatmul.mubr.bf16.gmra.mxu0 %v872
      %v1422 = vpop.f32.mrf.mxu0
      %v1423 = vadd.f32 0.0, %v1422
      %v1424 = vpop.f32.mrf.mxu0
      %v1425 = vpop.f32.mrf.mxu0
      %v1426 = vadd.f32 0.0, %v1425
      %v1427 = vpop.f32.mrf.mxu0
      %1428 = vmatprep.mubr.bf16.mxu0 %v877
      %1429 = vmatmul.mubr.bf16.gmra.mxu0 %v876
      %v1430 = vpop.f32.mrf.mxu0
      %v1431 = vadd.f32 0.0, %v1430
      %v1432 = vpop.f32.mrf.mxu0
      %v1433 = vpop.f32.mrf.mxu0
      %v1434 = vadd.f32 0.0, %v1433
      %v1435 = vpop.f32.mrf.mxu0
      %1436 = vmatprep.mubr.bf16.mxu0 %v881
      %1437 = vmatmul.mubr.bf16.gmra.mxu0 %v880
      %v1438 = vpop.f32.mrf.mxu0
      %v1439 = vadd.f32 0.0, %v1438
      %v1440 = vpop.f32.mrf.mxu0
      %v1441 = vpop.f32.mrf.mxu0
      %v1442 = vadd.f32 0.0, %v1441
      %v1443 = vpop.f32.mrf.mxu0
      %1444 = vmatprep.mubr.bf16.mxu0 %v885
      %1445 = vmatmul.mubr.bf16.gmra.mxu0 %v884
      %v1446 = vpop.f32.mrf.mxu0
      %v1447 = vadd.f32 0.0, %v1446
      %v1448 = vpop.f32.mrf.mxu0
      %v1449 = vpop.f32.mrf.mxu0
      %v1450 = vadd.f32 0.0, %v1449
      %v1451 = vpop.f32.mrf.mxu0
      %1452 = vmatprep.mubr.bf16.mxu0 %v889
      %1453 = vmatmul.mubr.bf16.gmra.mxu0 %v888
      %v1454 = vpop.f32.mrf.mxu0
      %v1455 = vadd.f32 0.0, %v1454
      %v1456 = vpop.f32.mrf.mxu0
      %v1457 = vpop.f32.mrf.mxu0
      %v1458 = vadd.f32 0.0, %v1457
      %v1459 = vpop.f32.mrf.mxu0
      %1460 = vmatprep.mubr.bf16.mxu0 %v893
      %1461 = vmatmul.mubr.bf16.gmra.mxu0 %v892
      %v1462 = vpop.f32.mrf.mxu0
      %v1463 = vadd.f32 0.0, %v1462
      %v1464 = vpop.f32.mrf.mxu0
      %v1465 = vpop.f32.mrf.mxu0
      %v1466 = vadd.f32 0.0, %v1465
      %v1467 = vpop.f32.mrf.mxu0
      %1468 = vmatprep.mubr.bf16.mxu0 %v897
      %1469 = vmatmul.mubr.bf16.gmra.mxu0 %v896
      %v1470 = vpop.f32.mrf.mxu0
      %v1471 = vadd.f32 0.0, %v1470
      %v1472 = vpop.f32.mrf.mxu0
      %v1473 = vpop.f32.mrf.mxu0
      %v1474 = vadd.f32 0.0, %v1473
      %v1475 = vpop.f32.mrf.mxu0
      %1476 = vmatprep.mubr.bf16.mxu0 %v901
      %1477 = vmatmul.mubr.bf16.gmra.mxu0 %v900
      %v1478 = vpop.f32.mrf.mxu0
      %v1479 = vadd.f32 0.0, %v1478
      %v1480 = vpop.f32.mrf.mxu0
      %v1481 = vpop.f32.mrf.mxu0
      %v1482 = vadd.f32 0.0, %v1481
      %v1483 = vpop.f32.mrf.mxu0
      %1484 = vmatprep.mubr.bf16.mxu0 %v905
      %1485 = vmatmul.mubr.bf16.gmra.mxu0 %v904
      %v1486 = vpop.f32.mrf.mxu0
      %v1487 = vadd.f32 0.0, %v1486
      %v1488 = vpop.f32.mrf.mxu0
      %v1489 = vpop.f32.mrf.mxu0
      %v1490 = vadd.f32 0.0, %v1489
      %v1491 = vpop.f32.mrf.mxu0
      %1492 = vmatprep.mubr.bf16.mxu0 %v909
      %1493 = vmatmul.mubr.bf16.gmra.mxu0 %v908
      %v1494 = vpop.f32.mrf.mxu0
      %v1495 = vadd.f32 0.0, %v1494
      %v1496 = vpop.f32.mrf.mxu0
      %v1497 = vpop.f32.mrf.mxu0
      %v1498 = vadd.f32 0.0, %v1497
      %v1499 = vpop.f32.mrf.mxu0
      %1500 = vmatprep.mubr.bf16.mxu0 %v913
      %1501 = vmatmul.mubr.bf16.gmra.mxu0 %v912
      %v1502 = vpop.f32.mrf.mxu0
      %v1503 = vadd.f32 0.0, %v1502
      %v1504 = vpop.f32.mrf.mxu0
      %v1505 = vpop.f32.mrf.mxu0
      %v1506 = vadd.f32 0.0, %v1505
      %v1507 = vpop.f32.mrf.mxu0
      %1508 = vmatprep.mubr.bf16.mxu0 %v917
      %1509 = vmatmul.mubr.bf16.gmra.mxu0 %v916
      %v1510 = vpop.f32.mrf.mxu0
      %v1511 = vadd.f32 0.0, %v1510
      %v1512 = vpop.f32.mrf.mxu0
      %v1513 = vpop.f32.mrf.mxu0
      %v1514 = vadd.f32 0.0, %v1513
      %v1515 = vpop.f32.mrf.mxu0
      %1516 = vmatprep.mubr.bf16.mxu0 %v921
      %1517 = vmatmul.mubr.bf16.gmra.mxu0 %v920
      %v1518 = vpop.f32.mrf.mxu0
      %v1519 = vadd.f32 0.0, %v1518
      %v1520 = vpop.f32.mrf.mxu0
      %v1521 = vpop.f32.mrf.mxu0
      %v1522 = vadd.f32 0.0, %v1521
      %v1523 = vpop.f32.mrf.mxu0
      %1524 = vmatprep.mubr.bf16.mxu0 %v925
      %1525 = vmatmul.mubr.bf16.gmra.mxu0 %v924
      %v1526 = vpop.f32.mrf.mxu0
      %v1527 = vadd.f32 0.0, %v1526
      %v1528 = vpop.f32.mrf.mxu0
      %v1529 = vpop.f32.mrf.mxu0
      %v1530 = vadd.f32 0.0, %v1529
      %v1531 = vpop.f32.mrf.mxu0
      %1532 = vmatprep.mubr.bf16.mxu0 %v929
      %1533 = vmatmul.mubr.bf16.gmra.mxu0 %v928
      %v1534 = vpop.f32.mrf.mxu0
      %v1535 = vadd.f32 0.0, %v1534
      %v1536 = vpop.f32.mrf.mxu0
      %v1537 = vpop.f32.mrf.mxu0
      %v1538 = vadd.f32 0.0, %v1537
      %v1539 = vpop.f32.mrf.mxu0
      %1540 = vdwg.mxu0
      %1541 = vmatprep.subr.bf16.mxu0 0
      %1542 = vmatpush1.bf16.msra.mxu0 %v1211
      %1543 = vmatprep.subr.bf16.mxu0 0
      %1544 = vmatpush1.bf16.msra.mxu0 %v1210
      %1545 = vmatprep.subr.bf16.mxu0 0
      %1546 = vmatpush1.bf16.msra.mxu0 %v1209
      %1547 = vmatprep.subr.bf16.mxu0 0
      %1548 = vmatpush1.bf16.msra.mxu0 %v1208
      %1549 = vmatprep.subr.bf16.mxu0 0
      %1550 = vmatpush1.bf16.msra.mxu0 %v1207
      %1551 = vmatprep.subr.bf16.mxu0 0
      %1552 = vmatpush1.bf16.msra.mxu0 %v1206
      %1553 = vmatprep.subr.bf16.mxu0 0
      %1554 = vmatpush1.bf16.msra.mxu0 %v1205
      %1555 = vmatprep.subr.bf16.mxu0 0
      %1556 = vmatpush1.bf16.msra.mxu0 %v1204
      %1557 = vmatprep.subr.bf16.mxu0 0
      %1558 = vmatpush2.bf16.msra.mxu0 %v1219
      %1559 = vmatprep.subr.bf16.mxu0 0
      %1560 = vmatpush2.bf16.msra.mxu0 %v1218
      %1561 = vmatprep.subr.bf16.mxu0 0
      %1562 = vmatpush2.bf16.msra.mxu0 %v1217
      %1563 = vmatprep.subr.bf16.mxu0 0
      %1564 = vmatpush2.bf16.msra.mxu0 %v1216
      %1565 = vmatprep.subr.bf16.mxu0 0
      %1566 = vmatpush2.bf16.msra.mxu0 %v1215
      %1567 = vmatprep.subr.bf16.mxu0 0
      %1568 = vmatpush2.bf16.msra.mxu0 %v1214
      %1569 = vmatprep.subr.bf16.mxu0 0
      %1570 = vmatpush2.bf16.msra.mxu0 %v1213
      %1571 = vmatprep.subr.bf16.mxu0 0
      %1572 = vmatpush2.bf16.msra.mxu0 %v1212
      %1573 = vmatprep.mubr.bf16.mxu0 %v807
      %1574 = vmatmul.mubr.bf16.gmra.mxu0 %v806
      %v1575 = vpop.f32.mrf.mxu0
      %v1576 = vadd.f32 %v1287, %v1575
      %v1577 = vpop.f32.mrf.mxu0
      %v1578 = vpop.f32.mrf.mxu0
      %v1579 = vadd.f32 %v1290, %v1578
      %v1580 = vpop.f32.mrf.mxu0
      %1581 = vmatprep.mubr.bf16.mxu0 %v811
      %1582 = vmatmul.mubr.bf16.gmra.mxu0 %v810
      %v1583 = vpop.f32.mrf.mxu0
      %v1584 = vadd.f32 %v1295, %v1583
      %v1585 = vpop.f32.mrf.mxu0
      %v1586 = vpop.f32.mrf.mxu0
      %v1587 = vadd.f32 %v1298, %v1586
      %v1588 = vpop.f32.mrf.mxu0
      %1589 = vmatprep.mubr.bf16.mxu0 %v815
      %1590 = vmatmul.mubr.bf16.gmra.mxu0 %v814
      %v1591 = vpop.f32.mrf.mxu0
      %v1592 = vadd.f32 %v1303, %v1591
      %v1593 = vpop.f32.mrf.mxu0
      %v1594 = vpop.f32.mrf.mxu0
      %v1595 = vadd.f32 %v1306, %v1594
      %v1596 = vpop.f32.mrf.mxu0
      %1597 = vmatprep.mubr.bf16.mxu0 %v819
      %1598 = vmatmul.mubr.bf16.gmra.mxu0 %v818
      %v1599 = vpop.f32.mrf.mxu0
      %v1600 = vadd.f32 %v1311, %v1599
      %v1601 = vpop.f32.mrf.mxu0
      %v1602 = vpop.f32.mrf.mxu0
      %v1603 = vadd.f32 %v1314, %v1602
      %v1604 = vpop.f32.mrf.mxu0
      %1605 = vmatprep.mubr.bf16.mxu0 %v823
      %1606 = vmatmul.mubr.bf16.gmra.mxu0 %v822
      %v1607 = vpop.f32.mrf.mxu0
      %v1608 = vadd.f32 %v1319, %v1607
      %v1609 = vpop.f32.mrf.mxu0
      %v1610 = vpop.f32.mrf.mxu0
      %v1611 = vadd.f32 %v1322, %v1610
      %v1612 = vpop.f32.mrf.mxu0
      %1613 = vmatprep.mubr.bf16.mxu0 %v827
      %1614 = vmatmul.mubr.bf16.gmra.mxu0 %v826
      %v1615 = vpop.f32.mrf.mxu0
      %v1616 = vadd.f32 %v1327, %v1615
      %v1617 = vpop.f32.mrf.mxu0
      %v1618 = vpop.f32.mrf.mxu0
      %v1619 = vadd.f32 %v1330, %v1618
      %v1620 = vpop.f32.mrf.mxu0
      %1621 = vmatprep.mubr.bf16.mxu0 %v831
      %1622 = vmatmul.mubr.bf16.gmra.mxu0 %v830
      %v1623 = vpop.f32.mrf.mxu0
      %v1624 = vadd.f32 %v1335, %v1623
      %v1625 = vpop.f32.mrf.mxu0
      %v1626 = vpop.f32.mrf.mxu0
      %v1627 = vadd.f32 %v1338, %v1626
      %v1628 = vpop.f32.mrf.mxu0
      %1629 = vmatprep.mubr.bf16.mxu0 %v835
      %1630 = vmatmul.mubr.bf16.gmra.mxu0 %v834
      %v1631 = vpop.f32.mrf.mxu0
      %v1632 = vadd.f32 %v1343, %v1631
      %v1633 = vpop.f32.mrf.mxu0
      %v1634 = vpop.f32.mrf.mxu0
      %v1635 = vadd.f32 %v1346, %v1634
      %v1636 = vpop.f32.mrf.mxu0
      %1637 = vmatprep.mubr.bf16.mxu0 %v839
      %1638 = vmatmul.mubr.bf16.gmra.mxu0 %v838
      %v1639 = vpop.f32.mrf.mxu0
      %v1640 = vadd.f32 %v1351, %v1639
      %v1641 = vpop.f32.mrf.mxu0
      %v1642 = vpop.f32.mrf.mxu0
      %v1643 = vadd.f32 %v1354, %v1642
      %v1644 = vpop.f32.mrf.mxu0
      %1645 = vmatprep.mubr.bf16.mxu0 %v843
      %1646 = vmatmul.mubr.bf16.gmra.mxu0 %v842
      %v1647 = vpop.f32.mrf.mxu0
      %v1648 = vadd.f32 %v1359, %v1647
      %v1649 = vpop.f32.mrf.mxu0
      %v1650 = vpop.f32.mrf.mxu0
      %v1651 = vadd.f32 %v1362, %v1650
      %v1652 = vpop.f32.mrf.mxu0
      %1653 = vmatprep.mubr.bf16.mxu0 %v847
      %1654 = vmatmul.mubr.bf16.gmra.mxu0 %v846
      %v1655 = vpop.f32.mrf.mxu0
      %v1656 = vadd.f32 %v1367, %v1655
      %v1657 = vpop.f32.mrf.mxu0
      %v1658 = vpop.f32.mrf.mxu0
      %v1659 = vadd.f32 %v1370, %v1658
      %v1660 = vpop.f32.mrf.mxu0
      %1661 = vmatprep.mubr.bf16.mxu0 %v851
      %1662 = vmatmul.mubr.bf16.gmra.mxu0 %v850
      %v1663 = vpop.f32.mrf.mxu0
      %v1664 = vadd.f32 %v1375, %v1663
      %v1665 = vpop.f32.mrf.mxu0
      %v1666 = vpop.f32.mrf.mxu0
      %v1667 = vadd.f32 %v1378, %v1666
      %v1668 = vpop.f32.mrf.mxu0
      %1669 = vmatprep.mubr.bf16.mxu0 %v855
      %1670 = vmatmul.mubr.bf16.gmra.mxu0 %v854
      %v1671 = vpop.f32.mrf.mxu0
      %v1672 = vadd.f32 %v1383, %v1671
      %v1673 = vpop.f32.mrf.mxu0
      %v1674 = vpop.f32.mrf.mxu0
      %v1675 = vadd.f32 %v1386, %v1674
      %v1676 = vpop.f32.mrf.mxu0
      %1677 = vmatprep.mubr.bf16.mxu0 %v859
      %1678 = vmatmul.mubr.bf16.gmra.mxu0 %v858
      %v1679 = vpop.f32.mrf.mxu0
      %v1680 = vadd.f32 %v1391, %v1679
      %v1681 = vpop.f32.mrf.mxu0
      %v1682 = vpop.f32.mrf.mxu0
      %v1683 = vadd.f32 %v1394, %v1682
      %v1684 = vpop.f32.mrf.mxu0
      %1685 = vmatprep.mubr.bf16.mxu0 %v863
      %1686 = vmatmul.mubr.bf16.gmra.mxu0 %v862
      %v1687 = vpop.f32.mrf.mxu0
      %v1688 = vadd.f32 %v1399, %v1687
      %v1689 = vpop.f32.mrf.mxu0
      %v1690 = vpop.f32.mrf.mxu0
      %v1691 = vadd.f32 %v1402, %v1690
      %v1692 = vpop.f32.mrf.mxu0
      %1693 = vmatprep.mubr.bf16.mxu0 %v867
      %1694 = vmatmul.mubr.bf16.gmra.mxu0 %v866
      %v1695 = vpop.f32.mrf.mxu0
      %v1696 = vadd.f32 %v1407, %v1695
      %v1697 = vpop.f32.mrf.mxu0
      %v1698 = vpop.f32.mrf.mxu0
      %v1699 = vadd.f32 %v1410, %v1698
      %v1700 = vpop.f32.mrf.mxu0
      %1701 = vmatprep.mubr.bf16.mxu0 %v871
      %1702 = vmatmul.mubr.bf16.gmra.mxu0 %v870
      %v1703 = vpop.f32.mrf.mxu0
      %v1704 = vadd.f32 %v1415, %v1703
      %v1705 = vpop.f32.mrf.mxu0
      %v1706 = vpop.f32.mrf.mxu0
      %v1707 = vadd.f32 %v1418, %v1706
      %v1708 = vpop.f32.mrf.mxu0
      %1709 = vmatprep.mubr.bf16.mxu0 %v875
      %1710 = vmatmul.mubr.bf16.gmra.mxu0 %v874
      %v1711 = vpop.f32.mrf.mxu0
      %v1712 = vadd.f32 %v1423, %v1711
      %v1713 = vpop.f32.mrf.mxu0
      %v1714 = vpop.f32.mrf.mxu0
      %v1715 = vadd.f32 %v1426, %v1714
      %v1716 = vpop.f32.mrf.mxu0
      %1717 = vmatprep.mubr.bf16.mxu0 %v879
      %1718 = vmatmul.mubr.bf16.gmra.mxu0 %v878
      %v1719 = vpop.f32.mrf.mxu0
      %v1720 = vadd.f32 %v1431, %v1719
      %v1721 = vpop.f32.mrf.mxu0
      %v1722 = vpop.f32.mrf.mxu0
      %v1723 = vadd.f32 %v1434, %v1722
      %v1724 = vpop.f32.mrf.mxu0
      %1725 = vmatprep.mubr.bf16.mxu0 %v883
      %1726 = vmatmul.mubr.bf16.gmra.mxu0 %v882
      %v1727 = vpop.f32.mrf.mxu0
      %v1728 = vadd.f32 %v1439, %v1727
      %v1729 = vpop.f32.mrf.mxu0
      %v1730 = vpop.f32.mrf.mxu0
      %v1731 = vadd.f32 %v1442, %v1730
      %v1732 = vpop.f32.mrf.mxu0
      %1733 = vmatprep.mubr.bf16.mxu0 %v887
      %1734 = vmatmul.mubr.bf16.gmra.mxu0 %v886
      %v1735 = vpop.f32.mrf.mxu0
      %v1736 = vadd.f32 %v1447, %v1735
      %v1737 = vpop.f32.mrf.mxu0
      %v1738 = vpop.f32.mrf.mxu0
      %v1739 = vadd.f32 %v1450, %v1738
      %v1740 = vpop.f32.mrf.mxu0
      %1741 = vmatprep.mubr.bf16.mxu0 %v891
      %1742 = vmatmul.mubr.bf16.gmra.mxu0 %v890
      %v1743 = vpop.f32.mrf.mxu0
      %v1744 = vadd.f32 %v1455, %v1743
      %v1745 = vpop.f32.mrf.mxu0
      %v1746 = vpop.f32.mrf.mxu0
      %v1747 = vadd.f32 %v1458, %v1746
      %v1748 = vpop.f32.mrf.mxu0
      %1749 = vmatprep.mubr.bf16.mxu0 %v895
      %1750 = vmatmul.mubr.bf16.gmra.mxu0 %v894
      %v1751 = vpop.f32.mrf.mxu0
      %v1752 = vadd.f32 %v1463, %v1751
      %v1753 = vpop.f32.mrf.mxu0
      %v1754 = vpop.f32.mrf.mxu0
      %v1755 = vadd.f32 %v1466, %v1754
      %v1756 = vpop.f32.mrf.mxu0
      %1757 = vmatprep.mubr.bf16.mxu0 %v899
      %1758 = vmatmul.mubr.bf16.gmra.mxu0 %v898
      %v1759 = vpop.f32.mrf.mxu0
      %v1760 = vadd.f32 %v1471, %v1759
      %v1761 = vpop.f32.mrf.mxu0
      %v1762 = vpop.f32.mrf.mxu0
      %v1763 = vadd.f32 %v1474, %v1762
      %v1764 = vpop.f32.mrf.mxu0
      %1765 = vmatprep.mubr.bf16.mxu0 %v903
      %1766 = vmatmul.mubr.bf16.gmra.mxu0 %v902
      %v1767 = vpop.f32.mrf.mxu0
      %v1768 = vadd.f32 %v1479, %v1767
      %v1769 = vpop.f32.mrf.mxu0
      %v1770 = vpop.f32.mrf.mxu0
      %v1771 = vadd.f32 %v1482, %v1770
      %v1772 = vpop.f32.mrf.mxu0
      %1773 = vmatprep.mubr.bf16.mxu0 %v907
      %1774 = vmatmul.mubr.bf16.gmra.mxu0 %v906
      %v1775 = vpop.f32.mrf.mxu0
      %v1776 = vadd.f32 %v1487, %v1775
      %v1777 = vpop.f32.mrf.mxu0
      %v1778 = vpop.f32.mrf.mxu0
      %v1779 = vadd.f32 %v1490, %v1778
      %v1780 = vpop.f32.mrf.mxu0
      %1781 = vmatprep.mubr.bf16.mxu0 %v911
      %1782 = vmatmul.mubr.bf16.gmra.mxu0 %v910
      %v1783 = vpop.f32.mrf.mxu0
      %v1784 = vadd.f32 %v1495, %v1783
      %v1785 = vpop.f32.mrf.mxu0
      %v1786 = vpop.f32.mrf.mxu0
      %v1787 = vadd.f32 %v1498, %v1786
      %v1788 = vpop.f32.mrf.mxu0
      %1789 = vmatprep.mubr.bf16.mxu0 %v915
      %1790 = vmatmul.mubr.bf16.gmra.mxu0 %v914
      %v1791 = vpop.f32.mrf.mxu0
      %v1792 = vadd.f32 %v1503, %v1791
      %v1793 = vpop.f32.mrf.mxu0
      %v1794 = vpop.f32.mrf.mxu0
      %v1795 = vadd.f32 %v1506, %v1794
      %v1796 = vpop.f32.mrf.mxu0
      %1797 = vmatprep.mubr.bf16.mxu0 %v919
      %1798 = vmatmul.mubr.bf16.gmra.mxu0 %v918
      %v1799 = vpop.f32.mrf.mxu0
      %v1800 = vadd.f32 %v1511, %v1799
      %v1801 = vpop.f32.mrf.mxu0
      %v1802 = vpop.f32.mrf.mxu0
      %v1803 = vadd.f32 %v1514, %v1802
      %v1804 = vpop.f32.mrf.mxu0
      %1805 = vmatprep.mubr.bf16.mxu0 %v923
      %1806 = vmatmul.mubr.bf16.gmra.mxu0 %v922
      %v1807 = vpop.f32.mrf.mxu0
      %v1808 = vadd.f32 %v1519, %v1807
      %v1809 = vpop.f32.mrf.mxu0
      %v1810 = vpop.f32.mrf.mxu0
      %v1811 = vadd.f32 %v1522, %v1810
      %v1812 = vpop.f32.mrf.mxu0
      %1813 = vmatprep.mubr.bf16.mxu0 %v927
      %1814 = vmatmul.mubr.bf16.gmra.mxu0 %v926
      %v1815 = vpop.f32.mrf.mxu0
      %v1816 = vadd.f32 %v1527, %v1815
      %v1817 = vpop.f32.mrf.mxu0
      %v1818 = vpop.f32.mrf.mxu0
      %v1819 = vadd.f32 %v1530, %v1818
      %v1820 = vpop.f32.mrf.mxu0
      %1821 = vmatprep.mubr.bf16.mxu0 %v931
      %1822 = vmatmul.mubr.bf16.gmra.mxu0 %v930
      %v1823 = vpop.f32.mrf.mxu0
      %v1824 = vadd.f32 %v1535, %v1823
      %v1825 = vpop.f32.mrf.mxu0
      %v1826 = vpop.f32.mrf.mxu0
      %v1827 = vadd.f32 %v1538, %v1826
      %v1828 = vpop.f32.mrf.mxu0
      %1829 = vdwg.mxu0
      %v1830 = vadd.f32 %v228, %v1576
      %v1831 = vadd.f32 %v229, %v1579
      %v1832 = vadd.f32 %v230, %v1584
      %v1833 = vadd.f32 %v231, %v1587
      %v1834 = vadd.f32 %v232, %v1592
      %v1835 = vadd.f32 %v233, %v1595
      %v1836 = vadd.f32 %v234, %v1600
      %v1837 = vadd.f32 %v235, %v1603
      %v1838 = vadd.f32 %v236, %v1608
      %v1839 = vadd.f32 %v237, %v1611
      %v1840 = vadd.f32 %v238, %v1616
      %v1841 = vadd.f32 %v239, %v1619
      %v1842 = vadd.f32 %v240, %v1624
      %v1843 = vadd.f32 %v241, %v1627
      %v1844 = vadd.f32 %v242, %v1632
      %v1845 = vadd.f32 %v243, %v1635
      %v1846 = vadd.f32 %v244, %v1640
      %v1847 = vadd.f32 %v245, %v1643
      %v1848 = vadd.f32 %v246, %v1648
      %v1849 = vadd.f32 %v247, %v1651
      %v1850 = vadd.f32 %v248, %v1656
      %v1851 = vadd.f32 %v249, %v1659
      %v1852 = vadd.f32 %v250, %v1664
      %v1853 = vadd.f32 %v251, %v1667
      %v1854 = vadd.f32 %v252, %v1672
      %v1855 = vadd.f32 %v253, %v1675
      %v1856 = vadd.f32 %v254, %v1680
      %v1857 = vadd.f32 %v255, %v1683
      %v1858 = vadd.f32 %v256, %v1688
      %v1859 = vadd.f32 %v257, %v1691
      %v1860 = vadd.f32 %v258, %v1696
      %v1861 = vadd.f32 %v259, %v1699
      %v1862 = vadd.f32 %v260, %v1704
      %v1863 = vadd.f32 %v261, %v1707
      %v1864 = vadd.f32 %v262, %v1712
      %v1865 = vadd.f32 %v263, %v1715
      %v1866 = vadd.f32 %v264, %v1720
      %v1867 = vadd.f32 %v265, %v1723
      %v1868 = vadd.f32 %v266, %v1728
      %v1869 = vadd.f32 %v267, %v1731
      %v1870 = vadd.f32 %v268, %v1736
      %v1871 = vadd.f32 %v269, %v1739
      %v1872 = vadd.f32 %v270, %v1744
      %v1873 = vadd.f32 %v271, %v1747
      %v1874 = vadd.f32 %v272, %v1752
      %v1875 = vadd.f32 %v273, %v1755
      %v1876 = vadd.f32 %v274, %v1760
      %v1877 = vadd.f32 %v275, %v1763
      %v1878 = vadd.f32 %v276, %v1768
      %v1879 = vadd.f32 %v277, %v1771
      %v1880 = vadd.f32 %v278, %v1776
      %v1881 = vadd.f32 %v279, %v1779
      %v1882 = vadd.f32 %v280, %v1784
      %v1883 = vadd.f32 %v281, %v1787
      %v1884 = vadd.f32 %v282, %v1792
      %v1885 = vadd.f32 %v283, %v1795
      %v1886 = vadd.f32 %v284, %v1800
      %v1887 = vadd.f32 %v285, %v1803
      %v1888 = vadd.f32 %v286, %v1808
      %v1889 = vadd.f32 %v287, %v1811
      %v1890 = vadd.f32 %v288, %v1816
      %v1891 = vadd.f32 %v289, %v1819
      %v1892 = vadd.f32 %v290, %v1824
      %v1893 = vadd.f32 %v291, %v1827
      %1894 = vst [vmem:[#allocation2] sm:$0xff] %v1830
      %1895 = vst [vmem:[#allocation2 + $0x8] sm:$0xff] %v1831
      %1896 = vst [vmem:[#allocation2 + $0x10] sm:$0xff] %v1832
      %1897 = vst [vmem:[#allocation2 + $0x18] sm:$0xff] %v1833
      %1898 = vst [vmem:[#allocation2 + $0x20] sm:$0xff] %v1834
      %1899 = vst [vmem:[#allocation2 + $0x28] sm:$0xff] %v1835
      %1900 = vst [vmem:[#allocation2 + $0x30] sm:$0xff] %v1836
      %1901 = vst [vmem:[#allocation2 + $0x38] sm:$0xff] %v1837
      %1902 = vst [vmem:[#allocation2 + $0x40] sm:$0xff] %v1838
      %1903 = vst [vmem:[#allocation2 + $0x48] sm:$0xff] %v1839
      %1904 = vst [vmem:[#allocation2 + $0x50] sm:$0xff] %v1840
      %1905 = vst [vmem:[#allocation2 + $0x58] sm:$0xff] %v1841
      %1906 = vst [vmem:[#allocation2 + $0x60] sm:$0xff] %v1842
      %1907 = vst [vmem:[#allocation2 + $0x68] sm:$0xff] %v1843
      %1908 = vst [vmem:[#allocation2 + $0x70] sm:$0xff] %v1844
      %1909 = vst [vmem:[#allocation2 + $0x78] sm:$0xff] %v1845
      %1910 = vst [vmem:[#allocation2 + $0x80] sm:$0xff] %v1846
      %1911 = vst [vmem:[#allocation2 + $0x88] sm:$0xff] %v1847
      %1912 = vst [vmem:[#allocation2 + $0x90] sm:$0xff] %v1848
      %1913 = vst [vmem:[#allocation2 + $0x98] sm:$0xff] %v1849
      %1914 = vst [vmem:[#allocation2 + $0xa0] sm:$0xff] %v1850
      %1915 = vst [vmem:[#allocation2 + $0xa8] sm:$0xff] %v1851
      %1916 = vst [vmem:[#allocation2 + $0xb0] sm:$0xff] %v1852
      %1917 = vst [vmem:[#allocation2 + $0xb8] sm:$0xff] %v1853
      %1918 = vst [vmem:[#allocation2 + $0xc0] sm:$0xff] %v1854
      %1919 = vst [vmem:[#allocation2 + $0xc8] sm:$0xff] %v1855
      %1920 = vst [vmem:[#allocation2 + $0xd0] sm:$0xff] %v1856
      %1921 = vst [vmem:[#allocation2 + $0xd8] sm:$0xff] %v1857
      %1922 = vst [vmem:[#allocation2 + $0xe0] sm:$0xff] %v1858
      %1923 = vst [vmem:[#allocation2 + $0xe8] sm:$0xff] %v1859
      %1924 = vst [vmem:[#allocation2 + $0xf0] sm:$0xff] %v1860
      %1925 = vst [vmem:[#allocation2 + $0xf8] sm:$0xff] %v1861
      %1926 = vst [vmem:[#allocation2 + $0x100] sm:$0xff] %v1862
      %1927 = vst [vmem:[#allocation2 + $0x108] sm:$0xff] %v1863
      %1928 = vst [vmem:[#allocation2 + $0x110] sm:$0xff] %v1864
      %1929 = vst [vmem:[#allocation2 + $0x118] sm:$0xff] %v1865
      %1930 = vst [vmem:[#allocation2 + $0x120] sm:$0xff] %v1866
      %1931 = vst [vmem:[#allocation2 + $0x128] sm:$0xff] %v1867
      %1932 = vst [vmem:[#allocation2 + $0x130] sm:$0xff] %v1868
      %1933 = vst [vmem:[#allocation2 + $0x138] sm:$0xff] %v1869
      %1934 = vst [vmem:[#allocation2 + $0x140] sm:$0xff] %v1870
      %1935 = vst [vmem:[#allocation2 + $0x148] sm:$0xff] %v1871
      %1936 = vst [vmem:[#allocation2 + $0x150] sm:$0xff] %v1872
      %1937 = vst [vmem:[#allocation2 + $0x158] sm:$0xff] %v1873
      %1938 = vst [vmem:[#allocation2 + $0x160] sm:$0xff] %v1874
      %1939 = vst [vmem:[#allocation2 + $0x168] sm:$0xff] %v1875
      %1940 = vst [vmem:[#allocation2 + $0x170] sm:$0xff] %v1876
      %1941 = vst [vmem:[#allocation2 + $0x178] sm:$0xff] %v1877
      %1942 = vst [vmem:[#allocation2 + $0x180] sm:$0xff] %v1878
      %1943 = vst [vmem:[#allocation2 + $0x188] sm:$0xff] %v1879
      %1944 = vst [vmem:[#allocation2 + $0x190] sm:$0xff] %v1880
      %1945 = vst [vmem:[#allocation2 + $0x198] sm:$0xff] %v1881
      %1946 = vst [vmem:[#allocation2 + $0x1a0] sm:$0xff] %v1882
      %1947 = vst [vmem:[#allocation2 + $0x1a8] sm:$0xff] %v1883
      %1948 = vst [vmem:[#allocation2 + $0x1b0] sm:$0xff] %v1884
      %1949 = vst [vmem:[#allocation2 + $0x1b8] sm:$0xff] %v1885
      %1950 = vst [vmem:[#allocation2 + $0x1c0] sm:$0xff] %v1886
      %1951 = vst [vmem:[#allocation2 + $0x1c8] sm:$0xff] %v1887
      %1952 = vst [vmem:[#allocation2 + $0x1d0] sm:$0xff] %v1888
      %1953 = vst [vmem:[#allocation2 + $0x1d8] sm:$0xff] %v1889
      %1954 = vst [vmem:[#allocation2 + $0x1e0] sm:$0xff] %v1890
      %1955 = vst [vmem:[#allocation2 + $0x1e8] sm:$0xff] %v1891
      %1956 = vst [vmem:[#allocation2 + $0x1f0] sm:$0xff] %v1892
      %1957 = vst [vmem:[#allocation2 + $0x1f8] sm:$0xff] %v1893
    $region37: #{tpu_custom_call.1} parent=1 // pred_fallthru
      _
    // Predicated region
    $region38: #{tpu_custom_call.1} parent=1 // pred_check
      %p1958 = pneg %p84
    $region39: #{tpu_custom_call.1} parent=1 // pred_check_branch
      %1960 = sbr.rel (%p1958) target = $region41
    $region40: #{tpu_custom_call.1} parent=1 // pred_region
      %v1961 = vld [vmem:[#allocation2] sm:$0xff]
      %v1962 = vld [vmem:[#allocation2 + $0x8] sm:$0xff]
      %v1963 = vld [vmem:[#allocation2 + $0x10] sm:$0xff]
      %v1964 = vld [vmem:[#allocation2 + $0x18] sm:$0xff]
      %v1965 = vld [vmem:[#allocation2 + $0x20] sm:$0xff]
      %v1966 = vld [vmem:[#allocation2 + $0x28] sm:$0xff]
      %v1967 = vld [vmem:[#allocation2 + $0x30] sm:$0xff]
      %v1968 = vld [vmem:[#allocation2 + $0x38] sm:$0xff]
      %v1969 = vld [vmem:[#allocation2 + $0x40] sm:$0xff]
      %v1970 = vld [vmem:[#allocation2 + $0x48] sm:$0xff]
      %v1971 = vld [vmem:[#allocation2 + $0x50] sm:$0xff]
      %v1972 = vld [vmem:[#allocation2 + $0x58] sm:$0xff]
      %v1973 = vld [vmem:[#allocation2 + $0x60] sm:$0xff]
      %v1974 = vld [vmem:[#allocation2 + $0x68] sm:$0xff]
      %v1975 = vld [vmem:[#allocation2 + $0x70] sm:$0xff]
      %v1976 = vld [vmem:[#allocation2 + $0x78] sm:$0xff]
      %v1977 = vld [vmem:[#allocation2 + $0x80] sm:$0xff]
      %v1978 = vld [vmem:[#allocation2 + $0x88] sm:$0xff]
      %v1979 = vld [vmem:[#allocation2 + $0x90] sm:$0xff]
      %v1980 = vld [vmem:[#allocation2 + $0x98] sm:$0xff]
      %v1981 = vld [vmem:[#allocation2 + $0xa0] sm:$0xff]
      %v1982 = vld [vmem:[#allocation2 + $0xa8] sm:$0xff]
      %v1983 = vld [vmem:[#allocation2 + $0xb0] sm:$0xff]
      %v1984 = vld [vmem:[#allocation2 + $0xb8] sm:$0xff]
      %v1985 = vld [vmem:[#allocation2 + $0xc0] sm:$0xff]
      %v1986 = vld [vmem:[#allocation2 + $0xc8] sm:$0xff]
      %v1987 = vld [vmem:[#allocation2 + $0xd0] sm:$0xff]
      %v1988 = vld [vmem:[#allocation2 + $0xd8] sm:$0xff]
      %v1989 = vld [vmem:[#allocation2 + $0xe0] sm:$0xff]
      %v1990 = vld [vmem:[#allocation2 + $0xe8] sm:$0xff]
      %v1991 = vld [vmem:[#allocation2 + $0xf0] sm:$0xff]
      %v1992 = vld [vmem:[#allocation2 + $0xf8] sm:$0xff]
      %v1993 = vld [vmem:[#allocation2 + $0x100] sm:$0xff]
      %v1994 = vld [vmem:[#allocation2 + $0x108] sm:$0xff]
      %v1995 = vld [vmem:[#allocation2 + $0x110] sm:$0xff]
      %v1996 = vld [vmem:[#allocation2 + $0x118] sm:$0xff]
      %v1997 = vld [vmem:[#allocation2 + $0x120] sm:$0xff]
      %v1998 = vld [vmem:[#allocation2 + $0x128] sm:$0xff]
      %v1999 = vld [vmem:[#allocation2 + $0x130] sm:$0xff]
      %v2000 = vld [vmem:[#allocation2 + $0x138] sm:$0xff]
      %v2001 = vld [vmem:[#allocation2 + $0x140] sm:$0xff]
      %v2002 = vld [vmem:[#allocation2 + $0x148] sm:$0xff]
      %v2003 = vld [vmem:[#allocation2 + $0x150] sm:$0xff]
      %v2004 = vld [vmem:[#allocation2 + $0x158] sm:$0xff]
      %v2005 = vld [vmem:[#allocation2 + $0x160] sm:$0xff]
      %v2006 = vld [vmem:[#allocation2 + $0x168] sm:$0xff]
      %v2007 = vld [vmem:[#allocation2 + $0x170] sm:$0xff]
      %v2008 = vld [vmem:[#allocation2 + $0x178] sm:$0xff]
      %v2009 = vld [vmem:[#allocation2 + $0x180] sm:$0xff]
      %v2010 = vld [vmem:[#allocation2 + $0x188] sm:$0xff]
      %v2011 = vld [vmem:[#allocation2 + $0x190] sm:$0xff]
      %v2012 = vld [vmem:[#allocation2 + $0x198] sm:$0xff]
      %v2013 = vld [vmem:[#allocation2 + $0x1a0] sm:$0xff]
      %v2014 = vld [vmem:[#allocation2 + $0x1a8] sm:$0xff]
      %v2015 = vld [vmem:[#allocation2 + $0x1b0] sm:$0xff]
      %v2016 = vld [vmem:[#allocation2 + $0x1b8] sm:$0xff]
      %v2017 = vld [vmem:[#allocation2 + $0x1c0] sm:$0xff]
      %v2018 = vld [vmem:[#allocation2 + $0x1c8] sm:$0xff]
      %v2019 = vld [vmem:[#allocation2 + $0x1d0] sm:$0xff]
      %v2020 = vld [vmem:[#allocation2 + $0x1d8] sm:$0xff]
      %v2021 = vld [vmem:[#allocation2 + $0x1e0] sm:$0xff]
      %v2022 = vld [vmem:[#allocation2 + $0x1e8] sm:$0xff]
      %v2023 = vld [vmem:[#allocation2 + $0x1f0] sm:$0xff]
      %v2024 = vld [vmem:[#allocation2 + $0x1f8] sm:$0xff]
      %v2025 = vpack.c.bf16 %v1962, %v1961
      %v2026 = vpack.c.bf16 %v1964, %v1963
      %v2027 = vpack.c.bf16 %v1966, %v1965
      %v2028 = vpack.c.bf16 %v1968, %v1967
      %v2029 = vpack.c.bf16 %v1970, %v1969
      %v2030 = vpack.c.bf16 %v1972, %v1971
      %v2031 = vpack.c.bf16 %v1974, %v1973
      %v2032 = vpack.c.bf16 %v1976, %v1975
      %v2033 = vpack.c.bf16 %v1978, %v1977
      %v2034 = vpack.c.bf16 %v1980, %v1979
      %v2035 = vpack.c.bf16 %v1982, %v1981
      %v2036 = vpack.c.bf16 %v1984, %v1983
      %v2037 = vpack.c.bf16 %v1986, %v1985
      %v2038 = vpack.c.bf16 %v1988, %v1987
      %v2039 = vpack.c.bf16 %v1990, %v1989
      %v2040 = vpack.c.bf16 %v1992, %v1991
      %v2041 = vpack.c.bf16 %v1994, %v1993
      %v2042 = vpack.c.bf16 %v1996, %v1995
      %v2043 = vpack.c.bf16 %v1998, %v1997
      %v2044 = vpack.c.bf16 %v2000, %v1999
      %v2045 = vpack.c.bf16 %v2002, %v2001
      %v2046 = vpack.c.bf16 %v2004, %v2003
      %v2047 = vpack.c.bf16 %v2006, %v2005
      %v2048 = vpack.c.bf16 %v2008, %v2007
      %v2049 = vpack.c.bf16 %v2010, %v2009
      %v2050 = vpack.c.bf16 %v2012, %v2011
      %v2051 = vpack.c.bf16 %v2014, %v2013
      %v2052 = vpack.c.bf16 %v2016, %v2015
      %v2053 = vpack.c.bf16 %v2018, %v2017
      %v2054 = vpack.c.bf16 %v2020, %v2019
      %v2055 = vpack.c.bf16 %v2022, %v2021
      %v2056 = vpack.c.bf16 %v2024, %v2023
      %v2057 = vld [vmem:[#allocation11] sm:$0xf]
      %v2058 = vld [vmem:[#allocation11 + $0x4] sm:$0xf]
      %v2059 = vld [vmem:[#allocation11 + $0x8] sm:$0xf]
      %v2060 = vld [vmem:[#allocation11 + $0xc] sm:$0xf]
      %v2061 = vld [vmem:[#allocation11 + $0x10] sm:$0xf]
      %v2062 = vld [vmem:[#allocation11 + $0x14] sm:$0xf]
      %v2063 = vld [vmem:[#allocation11 + $0x18] sm:$0xf]
      %v2064 = vld [vmem:[#allocation11 + $0x1c] sm:$0xf]
      %v2065 = vld [vmem:[#allocation11 + $0x20] sm:$0xf]
      %v2066 = vld [vmem:[#allocation11 + $0x24] sm:$0xf]
      %v2067 = vld [vmem:[#allocation11 + $0x28] sm:$0xf]
      %v2068 = vld [vmem:[#allocation11 + $0x2c] sm:$0xf]
      %v2069 = vld [vmem:[#allocation11 + $0x30] sm:$0xf]
      %v2070 = vld [vmem:[#allocation11 + $0x34] sm:$0xf]
      %v2071 = vld [vmem:[#allocation11 + $0x38] sm:$0xf]
      %v2072 = vld [vmem:[#allocation11 + $0x3c] sm:$0xf]
      %v2073 = vld [vmem:[%s5] sm:$0x1]
      %v2075 = vlaneseq
      %v2076 = vshrl.u32 %v2075, 7
      %v2077 = vsub.s32 0, %v2076
      %v2078 = vrot.slane %v2073, %v2077
      %v2096 = vunpack.c.l.b16 %v2057
      %v2097 = vunpack.c.l.b16 %v2058
      %v2098 = vunpack.c.l.b16 %v2059
      %v2099 = vunpack.c.l.b16 %v2060
      %v2100 = vunpack.c.l.b16 %v2061
      %v2101 = vunpack.c.l.b16 %v2062
      %v2102 = vunpack.c.l.b16 %v2063
      %v2103 = vunpack.c.l.b16 %v2064
      %v2104 = vunpack.c.l.b16 %v2065
      %v2105 = vunpack.c.l.b16 %v2066
      %v2106 = vunpack.c.l.b16 %v2067
      %v2107 = vunpack.c.l.b16 %v2068
      %v2108 = vunpack.c.l.b16 %v2069
      %v2109 = vunpack.c.l.b16 %v2070
      %v2110 = vunpack.c.l.b16 %v2071
      %v2111 = vunpack.c.l.b16 %v2072
      %v2112 = vpack.c.b16 %v2097, %v2096
      %v2113 = vpack.c.b16 %v2099, %v2098
      %v2114 = vpack.c.b16 %v2101, %v2100
      %v2115 = vpack.c.b16 %v2103, %v2102
      %v2116 = vpack.c.b16 %v2105, %v2104
      %v2117 = vpack.c.b16 %v2107, %v2106
      %v2118 = vpack.c.b16 %v2109, %v2108
      %v2119 = vpack.c.b16 %v2111, %v2110
      %2128 = vmatprep.subr.bf16.mxu0 0
      %2129 = vmatpush1.bf16.msra.mxu0 %v2119
      %2130 = vmatprep.subr.bf16.mxu0 0
      %2131 = vmatpush1.bf16.msra.mxu0 %v2118
      %2132 = vmatprep.subr.bf16.mxu0 0
      %2133 = vmatpush1.bf16.msra.mxu0 %v2117
      %2134 = vmatprep.subr.bf16.mxu0 0
      %2135 = vmatpush1.bf16.msra.mxu0 %v2116
      %2136 = vmatprep.subr.bf16.mxu0 0
      %2137 = vmatpush1.bf16.msra.mxu0 %v2115
      %2138 = vmatprep.subr.bf16.mxu0 0
      %2139 = vmatpush1.bf16.msra.mxu0 %v2114
      %2140 = vmatprep.subr.bf16.mxu0 0
      %2141 = vmatpush1.bf16.msra.mxu0 %v2113
      %2142 = vmatprep.subr.bf16.mxu0 0
      %2143 = vmatpush1.bf16.msra.mxu0 %v2112
      %2144 = vmatprep.subr.bf16.mxu0 0
      %2145 = vmatpush2.bf16.msra.mxu0 0
      %2146 = vmatprep.subr.bf16.mxu0 0
      %2147 = vmatpush2.bf16.msra.mxu0 0
      %2148 = vmatprep.subr.bf16.mxu0 0
      %2149 = vmatpush2.bf16.msra.mxu0 0
      %2150 = vmatprep.subr.bf16.mxu0 0
      %2151 = vmatpush2.bf16.msra.mxu0 0
      %2152 = vmatprep.subr.bf16.mxu0 0
      %2153 = vmatpush2.bf16.msra.mxu0 0
      %2154 = vmatprep.subr.bf16.mxu0 0
      %2155 = vmatpush2.bf16.msra.mxu0 0
      %2156 = vmatprep.subr.bf16.mxu0 0
      %2157 = vmatpush2.bf16.msra.mxu0 0
      %2158 = vmatprep.subr.bf16.mxu0 0
      %2159 = vmatpush2.bf16.msra.mxu0 0
      %2160 = vmatprep.mubr.bf16.mxu0 0
      %2161 = vmatmul.mubr.bf16.gmra.mxu0 %v2025
      %v2162 = vpop.f32.mrf.mxu0
      %v2163 = vadd.f32 %v2078, %v2162
      %v2164 = vpop.f32.mrf.mxu0
      %v2165 = vpop.f32.mrf.mxu0
      %v2166 = vadd.f32 %v2078, %v2165
      %v2167 = vpop.f32.mrf.mxu0
      %2168 = vmatprep.mubr.bf16.mxu0 0
      %2169 = vmatmul.mubr.bf16.gmra.mxu0 %v2026
      %v2170 = vpop.f32.mrf.mxu0
      %v2171 = vadd.f32 %v2078, %v2170
      %v2172 = vpop.f32.mrf.mxu0
      %v2173 = vpop.f32.mrf.mxu0
      %v2174 = vadd.f32 %v2078, %v2173
      %v2175 = vpop.f32.mrf.mxu0
      %2176 = vmatprep.mubr.bf16.mxu0 0
      %2177 = vmatmul.mubr.bf16.gmra.mxu0 %v2027
      %v2178 = vpop.f32.mrf.mxu0
      %v2179 = vadd.f32 %v2078, %v2178
      %v2180 = vpop.f32.mrf.mxu0
      %v2181 = vpop.f32.mrf.mxu0
      %v2182 = vadd.f32 %v2078, %v2181
      %v2183 = vpop.f32.mrf.mxu0
      %2184 = vmatprep.mubr.bf16.mxu0 0
      %2185 = vmatmul.mubr.bf16.gmra.mxu0 %v2028
      %v2186 = vpop.f32.mrf.mxu0
      %v2187 = vadd.f32 %v2078, %v2186
      %v2188 = vpop.f32.mrf.mxu0
      %v2189 = vpop.f32.mrf.mxu0
      %v2190 = vadd.f32 %v2078, %v2189
      %v2191 = vpop.f32.mrf.mxu0
      %2192 = vmatprep.mubr.bf16.mxu0 0
      %2193 = vmatmul.mubr.bf16.gmra.mxu0 %v2029
      %v2194 = vpop.f32.mrf.mxu0
      %v2195 = vadd.f32 %v2078, %v2194
      %v2196 = vpop.f32.mrf.mxu0
      %v2197 = vpop.f32.mrf.mxu0
      %v2198 = vadd.f32 %v2078, %v2197
      %v2199 = vpop.f32.mrf.mxu0
      %2200 = vmatprep.mubr.bf16.mxu0 0
      %2201 = vmatmul.mubr.bf16.gmra.mxu0 %v2030
      %v2202 = vpop.f32.mrf.mxu0
      %v2203 = vadd.f32 %v2078, %v2202
      %v2204 = vpop.f32.mrf.mxu0
      %v2205 = vpop.f32.mrf.mxu0
      %v2206 = vadd.f32 %v2078, %v2205
      %v2207 = vpop.f32.mrf.mxu0
      %2208 = vmatprep.mubr.bf16.mxu0 0
      %2209 = vmatmul.mubr.bf16.gmra.mxu0 %v2031
      %v2210 = vpop.f32.mrf.mxu0
      %v2211 = vadd.f32 %v2078, %v2210
      %v2212 = vpop.f32.mrf.mxu0
      %v2213 = vpop.f32.mrf.mxu0
      %v2214 = vadd.f32 %v2078, %v2213
      %v2215 = vpop.f32.mrf.mxu0
      %2216 = vmatprep.mubr.bf16.mxu0 0
      %2217 = vmatmul.mubr.bf16.gmra.mxu0 %v2032
      %v2218 = vpop.f32.mrf.mxu0
      %v2219 = vadd.f32 %v2078, %v2218
      %v2220 = vpop.f32.mrf.mxu0
      %v2221 = vpop.f32.mrf.mxu0
      %v2222 = vadd.f32 %v2078, %v2221
      %v2223 = vpop.f32.mrf.mxu0
      %2224 = vmatprep.mubr.bf16.mxu0 0
      %2225 = vmatmul.mubr.bf16.gmra.mxu0 %v2033
      %v2226 = vpop.f32.mrf.mxu0
      %v2227 = vadd.f32 %v2078, %v2226
      %v2228 = vpop.f32.mrf.mxu0
      %v2229 = vpop.f32.mrf.mxu0
      %v2230 = vadd.f32 %v2078, %v2229
      %v2231 = vpop.f32.mrf.mxu0
      %2232 = vmatprep.mubr.bf16.mxu0 0
      %2233 = vmatmul.mubr.bf16.gmra.mxu0 %v2034
      %v2234 = vpop.f32.mrf.mxu0
      %v2235 = vadd.f32 %v2078, %v2234
      %v2236 = vpop.f32.mrf.mxu0
      %v2237 = vpop.f32.mrf.mxu0
      %v2238 = vadd.f32 %v2078, %v2237
      %v2239 = vpop.f32.mrf.mxu0
      %2240 = vmatprep.mubr.bf16.mxu0 0
      %2241 = vmatmul.mubr.bf16.gmra.mxu0 %v2035
      %v2242 = vpop.f32.mrf.mxu0
      %v2243 = vadd.f32 %v2078, %v2242
      %v2244 = vpop.f32.mrf.mxu0
      %v2245 = vpop.f32.mrf.mxu0
      %v2246 = vadd.f32 %v2078, %v2245
      %v2247 = vpop.f32.mrf.mxu0
      %2248 = vmatprep.mubr.bf16.mxu0 0
      %2249 = vmatmul.mubr.bf16.gmra.mxu0 %v2036
      %v2250 = vpop.f32.mrf.mxu0
      %v2251 = vadd.f32 %v2078, %v2250
      %v2252 = vpop.f32.mrf.mxu0
      %v2253 = vpop.f32.mrf.mxu0
      %v2254 = vadd.f32 %v2078, %v2253
      %v2255 = vpop.f32.mrf.mxu0
      %2256 = vmatprep.mubr.bf16.mxu0 0
      %2257 = vmatmul.mubr.bf16.gmra.mxu0 %v2037
      %v2258 = vpop.f32.mrf.mxu0
      %v2259 = vadd.f32 %v2078, %v2258
      %v2260 = vpop.f32.mrf.mxu0
      %v2261 = vpop.f32.mrf.mxu0
      %v2262 = vadd.f32 %v2078, %v2261
      %v2263 = vpop.f32.mrf.mxu0
      %2264 = vmatprep.mubr.bf16.mxu0 0
      %2265 = vmatmul.mubr.bf16.gmra.mxu0 %v2038
      %v2266 = vpop.f32.mrf.mxu0
      %v2267 = vadd.f32 %v2078, %v2266
      %v2268 = vpop.f32.mrf.mxu0
      %v2269 = vpop.f32.mrf.mxu0
      %v2270 = vadd.f32 %v2078, %v2269
      %v2271 = vpop.f32.mrf.mxu0
      %2272 = vmatprep.mubr.bf16.mxu0 0
      %2273 = vmatmul.mubr.bf16.gmra.mxu0 %v2039
      %v2274 = vpop.f32.mrf.mxu0
      %v2275 = vadd.f32 %v2078, %v2274
      %v2276 = vpop.f32.mrf.mxu0
      %v2277 = vpop.f32.mrf.mxu0
      %v2278 = vadd.f32 %v2078, %v2277
      %v2279 = vpop.f32.mrf.mxu0
      %2280 = vmatprep.mubr.bf16.mxu0 0
      %2281 = vmatmul.mubr.bf16.gmra.mxu0 %v2040
      %v2282 = vpop.f32.mrf.mxu0
      %v2283 = vadd.f32 %v2078, %v2282
      %v2284 = vpop.f32.mrf.mxu0
      %v2285 = vpop.f32.mrf.mxu0
      %v2286 = vadd.f32 %v2078, %v2285
      %v2287 = vpop.f32.mrf.mxu0
      %2288 = vmatprep.mubr.bf16.mxu0 0
      %2289 = vmatmul.mubr.bf16.gmra.mxu0 %v2041
      %v2290 = vpop.f32.mrf.mxu0
      %v2291 = vadd.f32 %v2078, %v2290
      %v2292 = vpop.f32.mrf.mxu0
      %v2293 = vpop.f32.mrf.mxu0
      %v2294 = vadd.f32 %v2078, %v2293
      %v2295 = vpop.f32.mrf.mxu0
      %2296 = vmatprep.mubr.bf16.mxu0 0
      %2297 = vmatmul.mubr.bf16.gmra.mxu0 %v2042
      %v2298 = vpop.f32.mrf.mxu0
      %v2299 = vadd.f32 %v2078, %v2298
      %v2300 = vpop.f32.mrf.mxu0
      %v2301 = vpop.f32.mrf.mxu0
      %v2302 = vadd.f32 %v2078, %v2301
      %v2303 = vpop.f32.mrf.mxu0
      %2304 = vmatprep.mubr.bf16.mxu0 0
      %2305 = vmatmul.mubr.bf16.gmra.mxu0 %v2043
      %v2306 = vpop.f32.mrf.mxu0
      %v2307 = vadd.f32 %v2078, %v2306
      %v2308 = vpop.f32.mrf.mxu0
      %v2309 = vpop.f32.mrf.mxu0
      %v2310 = vadd.f32 %v2078, %v2309
      %v2311 = vpop.f32.mrf.mxu0
      %2312 = vmatprep.mubr.bf16.mxu0 0
      %2313 = vmatmul.mubr.bf16.gmra.mxu0 %v2044
      %v2314 = vpop.f32.mrf.mxu0
      %v2315 = vadd.f32 %v2078, %v2314
      %v2316 = vpop.f32.mrf.mxu0
      %v2317 = vpop.f32.mrf.mxu0
      %v2318 = vadd.f32 %v2078, %v2317
      %v2319 = vpop.f32.mrf.mxu0
      %2320 = vmatprep.mubr.bf16.mxu0 0
      %2321 = vmatmul.mubr.bf16.gmra.mxu0 %v2045
      %v2322 = vpop.f32.mrf.mxu0
      %v2323 = vadd.f32 %v2078, %v2322
      %v2324 = vpop.f32.mrf.mxu0
      %v2325 = vpop.f32.mrf.mxu0
      %v2326 = vadd.f32 %v2078, %v2325
      %v2327 = vpop.f32.mrf.mxu0
      %2328 = vmatprep.mubr.bf16.mxu0 0
      %2329 = vmatmul.mubr.bf16.gmra.mxu0 %v2046
      %v2330 = vpop.f32.mrf.mxu0
      %v2331 = vadd.f32 %v2078, %v2330
      %v2332 = vpop.f32.mrf.mxu0
      %v2333 = vpop.f32.mrf.mxu0
      %v2334 = vadd.f32 %v2078, %v2333
      %v2335 = vpop.f32.mrf.mxu0
      %2336 = vmatprep.mubr.bf16.mxu0 0
      %2337 = vmatmul.mubr.bf16.gmra.mxu0 %v2047
      %v2338 = vpop.f32.mrf.mxu0
      %v2339 = vadd.f32 %v2078, %v2338
      %v2340 = vpop.f32.mrf.mxu0
      %v2341 = vpop.f32.mrf.mxu0
      %v2342 = vadd.f32 %v2078, %v2341
      %v2343 = vpop.f32.mrf.mxu0
      %2344 = vmatprep.mubr.bf16.mxu0 0
      %2345 = vmatmul.mubr.bf16.gmra.mxu0 %v2048
      %v2346 = vpop.f32.mrf.mxu0
      %v2347 = vadd.f32 %v2078, %v2346
      %v2348 = vpop.f32.mrf.mxu0
      %v2349 = vpop.f32.mrf.mxu0
      %v2350 = vadd.f32 %v2078, %v2349
      %v2351 = vpop.f32.mrf.mxu0
      %2352 = vmatprep.mubr.bf16.mxu0 0
      %2353 = vmatmul.mubr.bf16.gmra.mxu0 %v2049
      %v2354 = vpop.f32.mrf.mxu0
      %v2355 = vadd.f32 %v2078, %v2354
      %v2356 = vpop.f32.mrf.mxu0
      %v2357 = vpop.f32.mrf.mxu0
      %v2358 = vadd.f32 %v2078, %v2357
      %v2359 = vpop.f32.mrf.mxu0
      %2360 = vmatprep.mubr.bf16.mxu0 0
      %2361 = vmatmul.mubr.bf16.gmra.mxu0 %v2050
      %v2362 = vpop.f32.mrf.mxu0
      %v2363 = vadd.f32 %v2078, %v2362
      %v2364 = vpop.f32.mrf.mxu0
      %v2365 = vpop.f32.mrf.mxu0
      %v2366 = vadd.f32 %v2078, %v2365
      %v2367 = vpop.f32.mrf.mxu0
      %2368 = vmatprep.mubr.bf16.mxu0 0
      %2369 = vmatmul.mubr.bf16.gmra.mxu0 %v2051
      %v2370 = vpop.f32.mrf.mxu0
      %v2371 = vadd.f32 %v2078, %v2370
      %v2372 = vpop.f32.mrf.mxu0
      %v2373 = vpop.f32.mrf.mxu0
      %v2374 = vadd.f32 %v2078, %v2373
      %v2375 = vpop.f32.mrf.mxu0
      %2376 = vmatprep.mubr.bf16.mxu0 0
      %2377 = vmatmul.mubr.bf16.gmra.mxu0 %v2052
      %v2378 = vpop.f32.mrf.mxu0
      %v2379 = vadd.f32 %v2078, %v2378
      %v2380 = vpop.f32.mrf.mxu0
      %v2381 = vpop.f32.mrf.mxu0
      %v2382 = vadd.f32 %v2078, %v2381
      %v2383 = vpop.f32.mrf.mxu0
      %2384 = vmatprep.mubr.bf16.mxu0 0
      %2385 = vmatmul.mubr.bf16.gmra.mxu0 %v2053
      %v2386 = vpop.f32.mrf.mxu0
      %v2387 = vadd.f32 %v2078, %v2386
      %v2388 = vpop.f32.mrf.mxu0
      %v2389 = vpop.f32.mrf.mxu0
      %v2390 = vadd.f32 %v2078, %v2389
      %v2391 = vpop.f32.mrf.mxu0
      %2392 = vmatprep.mubr.bf16.mxu0 0
      %2393 = vmatmul.mubr.bf16.gmra.mxu0 %v2054
      %v2394 = vpop.f32.mrf.mxu0
      %v2395 = vadd.f32 %v2078, %v2394
      %v2396 = vpop.f32.mrf.mxu0
      %v2397 = vpop.f32.mrf.mxu0
      %v2398 = vadd.f32 %v2078, %v2397
      %v2399 = vpop.f32.mrf.mxu0
      %2400 = vmatprep.mubr.bf16.mxu0 0
      %2401 = vmatmul.mubr.bf16.gmra.mxu0 %v2055
      %v2402 = vpop.f32.mrf.mxu0
      %v2403 = vadd.f32 %v2078, %v2402
      %v2404 = vpop.f32.mrf.mxu0
      %v2405 = vpop.f32.mrf.mxu0
      %v2406 = vadd.f32 %v2078, %v2405
      %v2407 = vpop.f32.mrf.mxu0
      %2408 = vmatprep.mubr.bf16.mxu0 0
      %2409 = vmatmul.mubr.bf16.gmra.mxu0 %v2056
      %v2410 = vpop.f32.mrf.mxu0
      %v2411 = vadd.f32 %v2078, %v2410
      %v2412 = vpop.f32.mrf.mxu0
      %v2413 = vpop.f32.mrf.mxu0
      %v2414 = vadd.f32 %v2078, %v2413
      %v2415 = vpop.f32.mrf.mxu0
      %2416 = vdwg.mxu0
      %v2417 = vmax.f32 %v2163, 0.0
      %v2418 = vmax.f32 %v2166, 0.0
      %v2419 = vmax.f32 %v2171, 0.0
      %v2420 = vmax.f32 %v2174, 0.0
      %v2421 = vmax.f32 %v2179, 0.0
      %v2422 = vmax.f32 %v2182, 0.0
      %v2423 = vmax.f32 %v2187, 0.0
      %v2424 = vmax.f32 %v2190, 0.0
      %v2425 = vmax.f32 %v2195, 0.0
      %v2426 = vmax.f32 %v2198, 0.0
      %v2427 = vmax.f32 %v2203, 0.0
      %v2428 = vmax.f32 %v2206, 0.0
      %v2429 = vmax.f32 %v2211, 0.0
      %v2430 = vmax.f32 %v2214, 0.0
      %v2431 = vmax.f32 %v2219, 0.0
      %v2432 = vmax.f32 %v2222, 0.0
      %v2433 = vmax.f32 %v2227, 0.0
      %v2434 = vmax.f32 %v2230, 0.0
      %v2435 = vmax.f32 %v2235, 0.0
      %v2436 = vmax.f32 %v2238, 0.0
      %v2437 = vmax.f32 %v2243, 0.0
      %v2438 = vmax.f32 %v2246, 0.0
      %v2439 = vmax.f32 %v2251, 0.0
      %v2440 = vmax.f32 %v2254, 0.0
      %v2441 = vmax.f32 %v2259, 0.0
      %v2442 = vmax.f32 %v2262, 0.0
      %v2443 = vmax.f32 %v2267, 0.0
      %v2444 = vmax.f32 %v2270, 0.0
      %v2445 = vmax.f32 %v2275, 0.0
      %v2446 = vmax.f32 %v2278, 0.0
      %v2447 = vmax.f32 %v2283, 0.0
      %v2448 = vmax.f32 %v2286, 0.0
      %v2449 = vmax.f32 %v2291, 0.0
      %v2450 = vmax.f32 %v2294, 0.0
      %v2451 = vmax.f32 %v2299, 0.0
      %v2452 = vmax.f32 %v2302, 0.0
      %v2453 = vmax.f32 %v2307, 0.0
      %v2454 = vmax.f32 %v2310, 0.0
      %v2455 = vmax.f32 %v2315, 0.0
      %v2456 = vmax.f32 %v2318, 0.0
      %v2457 = vmax.f32 %v2323, 0.0
      %v2458 = vmax.f32 %v2326, 0.0
      %v2459 = vmax.f32 %v2331, 0.0
      %v2460 = vmax.f32 %v2334, 0.0
      %v2461 = vmax.f32 %v2339, 0.0
      %v2462 = vmax.f32 %v2342, 0.0
      %v2463 = vmax.f32 %v2347, 0.0
      %v2464 = vmax.f32 %v2350, 0.0
      %v2465 = vmax.f32 %v2355, 0.0
      %v2466 = vmax.f32 %v2358, 0.0
      %v2467 = vmax.f32 %v2363, 0.0
      %v2468 = vmax.f32 %v2366, 0.0
      %v2469 = vmax.f32 %v2371, 0.0
      %v2470 = vmax.f32 %v2374, 0.0
      %v2471 = vmax.f32 %v2379, 0.0
      %v2472 = vmax.f32 %v2382, 0.0
      %v2473 = vmax.f32 %v2387, 0.0
      %v2474 = vmax.f32 %v2390, 0.0
      %v2475 = vmax.f32 %v2395, 0.0
      %v2476 = vmax.f32 %v2398, 0.0
      %v2477 = vmax.f32 %v2403, 0.0
      %v2478 = vmax.f32 %v2406, 0.0
      %v2479 = vmax.f32 %v2411, 0.0
      %v2480 = vmax.f32 %v2414, 0.0
      %v2481 = vpack.c.bf16 %v2418, %v2417
      %v2482 = vpack.c.bf16 %v2420, %v2419
      %v2483 = vpack.c.bf16 %v2422, %v2421
      %v2484 = vpack.c.bf16 %v2424, %v2423
      %v2485 = vpack.c.bf16 %v2426, %v2425
      %v2486 = vpack.c.bf16 %v2428, %v2427
      %v2487 = vpack.c.bf16 %v2430, %v2429
      %v2488 = vpack.c.bf16 %v2432, %v2431
      %v2489 = vpack.c.bf16 %v2434, %v2433
      %v2490 = vpack.c.bf16 %v2436, %v2435
      %v2491 = vpack.c.bf16 %v2438, %v2437
      %v2492 = vpack.c.bf16 %v2440, %v2439
      %v2493 = vpack.c.bf16 %v2442, %v2441
      %v2494 = vpack.c.bf16 %v2444, %v2443
      %v2495 = vpack.c.bf16 %v2446, %v2445
      %v2496 = vpack.c.bf16 %v2448, %v2447
      %v2497 = vpack.c.bf16 %v2450, %v2449
      %v2498 = vpack.c.bf16 %v2452, %v2451
      %v2499 = vpack.c.bf16 %v2454, %v2453
      %v2500 = vpack.c.bf16 %v2456, %v2455
      %v2501 = vpack.c.bf16 %v2458, %v2457
      %v2502 = vpack.c.bf16 %v2460, %v2459
      %v2503 = vpack.c.bf16 %v2462, %v2461
      %v2504 = vpack.c.bf16 %v2464, %v2463
      %v2505 = vpack.c.bf16 %v2466, %v2465
      %v2506 = vpack.c.bf16 %v2468, %v2467
      %v2507 = vpack.c.bf16 %v2470, %v2469
      %v2508 = vpack.c.bf16 %v2472, %v2471
      %v2509 = vpack.c.bf16 %v2474, %v2473
      %v2510 = vpack.c.bf16 %v2476, %v2475
      %v2511 = vpack.c.bf16 %v2478, %v2477
      %v2512 = vpack.c.bf16 %v2480, %v2479
      %v2545 = vunpack.c.l.b16 %v2481
      %v2546 = vunpack.c.h.b16 %v2481
      %v2547 = vunpack.c.l.b16 %v2482
      %v2548 = vunpack.c.h.b16 %v2482
      %v2549 = vunpack.c.l.b16 %v2483
      %v2550 = vunpack.c.h.b16 %v2483
      %v2551 = vunpack.c.l.b16 %v2484
      %v2552 = vunpack.c.h.b16 %v2484
      %v2553 = vunpack.c.l.b16 %v2485
      %v2554 = vunpack.c.h.b16 %v2485
      %v2555 = vunpack.c.l.b16 %v2486
      %v2556 = vunpack.c.h.b16 %v2486
      %v2557 = vunpack.c.l.b16 %v2487
      %v2558 = vunpack.c.h.b16 %v2487
      %v2559 = vunpack.c.l.b16 %v2488
      %v2560 = vunpack.c.h.b16 %v2488
      %v2561 = vunpack.c.l.b16 %v2489
      %v2562 = vunpack.c.h.b16 %v2489
      %v2563 = vunpack.c.l.b16 %v2490
      %v2564 = vunpack.c.h.b16 %v2490
      %v2565 = vunpack.c.l.b16 %v2491
      %v2566 = vunpack.c.h.b16 %v2491
      %v2567 = vunpack.c.l.b16 %v2492
      %v2568 = vunpack.c.h.b16 %v2492
      %v2569 = vunpack.c.l.b16 %v2493
      %v2570 = vunpack.c.h.b16 %v2493
      %v2571 = vunpack.c.l.b16 %v2494
      %v2572 = vunpack.c.h.b16 %v2494
      %v2573 = vunpack.c.l.b16 %v2495
      %v2574 = vunpack.c.h.b16 %v2495
      %v2575 = vunpack.c.l.b16 %v2496
      %v2576 = vunpack.c.h.b16 %v2496
      %v2577 = vunpack.c.l.b16 %v2497
      %v2578 = vunpack.c.h.b16 %v2497
      %v2579 = vunpack.c.l.b16 %v2498
      %v2580 = vunpack.c.h.b16 %v2498
      %v2581 = vunpack.c.l.b16 %v2499
      %v2582 = vunpack.c.h.b16 %v2499
      %v2583 = vunpack.c.l.b16 %v2500
      %v2584 = vunpack.c.h.b16 %v2500
      %v2585 = vunpack.c.l.b16 %v2501
      %v2586 = vunpack.c.h.b16 %v2501
      %v2587 = vunpack.c.l.b16 %v2502
      %v2588 = vunpack.c.h.b16 %v2502
      %v2589 = vunpack.c.l.b16 %v2503
      %v2590 = vunpack.c.h.b16 %v2503
      %v2591 = vunpack.c.l.b16 %v2504
      %v2592 = vunpack.c.h.b16 %v2504
      %v2593 = vunpack.c.l.b16 %v2505
      %v2594 = vunpack.c.h.b16 %v2505
      %v2595 = vunpack.c.l.b16 %v2506
      %v2596 = vunpack.c.h.b16 %v2506
      %v2597 = vunpack.c.l.b16 %v2507
      %v2598 = vunpack.c.h.b16 %v2507
      %v2599 = vunpack.c.l.b16 %v2508
      %v2600 = vunpack.c.h.b16 %v2508
      %v2601 = vunpack.c.l.b16 %v2509
      %v2602 = vunpack.c.h.b16 %v2509
      %v2603 = vunpack.c.l.b16 %v2510
      %v2604 = vunpack.c.h.b16 %v2510
      %v2605 = vunpack.c.l.b16 %v2511
      %v2606 = vunpack.c.h.b16 %v2511
      %v2607 = vunpack.c.l.b16 %v2512
      %v2608 = vunpack.c.h.b16 %v2512
      %v2609 = vpack.c.b16 %v2545, %v2545
      %v2610 = vpack.c.b16 %v2546, %v2546
      %v2611 = vpack.c.b16 %v2547, %v2547
      %v2612 = vpack.c.b16 %v2548, %v2548
      %v2613 = vpack.c.b16 %v2549, %v2549
      %v2614 = vpack.c.b16 %v2550, %v2550
      %v2615 = vpack.c.b16 %v2551, %v2551
      %v2616 = vpack.c.b16 %v2552, %v2552
      %v2617 = vpack.c.b16 %v2553, %v2553
      %v2618 = vpack.c.b16 %v2554, %v2554
      %v2619 = vpack.c.b16 %v2555, %v2555
      %v2620 = vpack.c.b16 %v2556, %v2556
      %v2621 = vpack.c.b16 %v2557, %v2557
      %v2622 = vpack.c.b16 %v2558, %v2558
      %v2623 = vpack.c.b16 %v2559, %v2559
      %v2624 = vpack.c.b16 %v2560, %v2560
      %v2625 = vpack.c.b16 %v2561, %v2561
      %v2626 = vpack.c.b16 %v2562, %v2562
      %v2627 = vpack.c.b16 %v2563, %v2563
      %v2628 = vpack.c.b16 %v2564, %v2564
      %v2629 = vpack.c.b16 %v2565, %v2565
      %v2630 = vpack.c.b16 %v2566, %v2566
      %v2631 = vpack.c.b16 %v2567, %v2567
      %v2632 = vpack.c.b16 %v2568, %v2568
      %v2633 = vpack.c.b16 %v2569, %v2569
      %v2634 = vpack.c.b16 %v2570, %v2570
      %v2635 = vpack.c.b16 %v2571, %v2571
      %v2636 = vpack.c.b16 %v2572, %v2572
      %v2637 = vpack.c.b16 %v2573, %v2573
      %v2638 = vpack.c.b16 %v2574, %v2574
      %v2639 = vpack.c.b16 %v2575, %v2575
      %v2640 = vpack.c.b16 %v2576, %v2576
      %v2641 = vpack.c.b16 %v2577, %v2577
      %v2642 = vpack.c.b16 %v2578, %v2578
      %v2643 = vpack.c.b16 %v2579, %v2579
      %v2644 = vpack.c.b16 %v2580, %v2580
      %v2645 = vpack.c.b16 %v2581, %v2581
      %v2646 = vpack.c.b16 %v2582, %v2582
      %v2647 = vpack.c.b16 %v2583, %v2583
      %v2648 = vpack.c.b16 %v2584, %v2584
      %v2649 = vpack.c.b16 %v2585, %v2585
      %v2650 = vpack.c.b16 %v2586, %v2586
      %v2651 = vpack.c.b16 %v2587, %v2587
      %v2652 = vpack.c.b16 %v2588, %v2588
      %v2653 = vpack.c.b16 %v2589, %v2589
      %v2654 = vpack.c.b16 %v2590, %v2590
      %v2655 = vpack.c.b16 %v2591, %v2591
      %v2656 = vpack.c.b16 %v2592, %v2592
      %v2657 = vpack.c.b16 %v2593, %v2593
      %v2658 = vpack.c.b16 %v2594, %v2594
      %v2659 = vpack.c.b16 %v2595, %v2595
      %v2660 = vpack.c.b16 %v2596, %v2596
      %v2661 = vpack.c.b16 %v2597, %v2597
      %v2662 = vpack.c.b16 %v2598, %v2598
      %v2663 = vpack.c.b16 %v2599, %v2599
      %v2664 = vpack.c.b16 %v2600, %v2600
      %v2665 = vpack.c.b16 %v2601, %v2601
      %v2666 = vpack.c.b16 %v2602, %v2602
      %v2667 = vpack.c.b16 %v2603, %v2603
      %v2668 = vpack.c.b16 %v2604, %v2604
      %v2669 = vpack.c.b16 %v2605, %v2605
      %v2670 = vpack.c.b16 %v2606, %v2606
      %v2671 = vpack.c.b16 %v2607, %v2607
      %v2672 = vpack.c.b16 %v2608, %v2608
      %2737 = vst [vmem:[#allocation12] sm:$0xf] %v2609
      %2738 = vst [vmem:[#allocation12 + $0x4] sm:$0xf] %v2610
      %2739 = vst [vmem:[#allocation12 + $0x8] sm:$0xf] %v2611
      %2740 = vst [vmem:[#allocation12 + $0xc] sm:$0xf] %v2612
      %2741 = vst [vmem:[#allocation12 + $0x10] sm:$0xf] %v2613
      %2742 = vst [vmem:[#allocation12 + $0x14] sm:$0xf] %v2614
      %2743 = vst [vmem:[#allocation12 + $0x18] sm:$0xf] %v2615
      %2744 = vst [vmem:[#allocation12 + $0x1c] sm:$0xf] %v2616
      %2745 = vst [vmem:[#allocation12 + $0x20] sm:$0xf] %v2617
      %2746 = vst [vmem:[#allocation12 + $0x24] sm:$0xf] %v2618
      %2747 = vst [vmem:[#allocation12 + $0x28] sm:$0xf] %v2619
      %2748 = vst [vmem:[#allocation12 + $0x2c] sm:$0xf] %v2620
      %2749 = vst [vmem:[#allocation12 + $0x30] sm:$0xf] %v2621
      %2750 = vst [vmem:[#allocation12 + $0x34] sm:$0xf] %v2622
      %2751 = vst [vmem:[#allocation12 + $0x38] sm:$0xf] %v2623
      %2752 = vst [vmem:[#allocation12 + $0x3c] sm:$0xf] %v2624
      %2753 = vst [vmem:[#allocation12 + $0x40] sm:$0xf] %v2625
      %2754 = vst [vmem:[#allocation12 + $0x44] sm:$0xf] %v2626
      %2755 = vst [vmem:[#allocation12 + $0x48] sm:$0xf] %v2627
      %2756 = vst [vmem:[#allocation12 + $0x4c] sm:$0xf] %v2628
      %2757 = vst [vmem:[#allocation12 + $0x50] sm:$0xf] %v2629
      %2758 = vst [vmem:[#allocation12 + $0x54] sm:$0xf] %v2630
      %2759 = vst [vmem:[#allocation12 + $0x58] sm:$0xf] %v2631
      %2760 = vst [vmem:[#allocation12 + $0x5c] sm:$0xf] %v2632
      %2761 = vst [vmem:[#allocation12 + $0x60] sm:$0xf] %v2633
      %2762 = vst [vmem:[#allocation12 + $0x64] sm:$0xf] %v2634
      %2763 = vst [vmem:[#allocation12 + $0x68] sm:$0xf] %v2635
      %2764 = vst [vmem:[#allocation12 + $0x6c] sm:$0xf] %v2636
      %2765 = vst [vmem:[#allocation12 + $0x70] sm:$0xf] %v2637
      %2766 = vst [vmem:[#allocation12 + $0x74] sm:$0xf] %v2638
      %2767 = vst [vmem:[#allocation12 + $0x78] sm:$0xf] %v2639
      %2768 = vst [vmem:[#allocation12 + $0x7c] sm:$0xf] %v2640
      %2769 = vst [vmem:[#allocation12 + $0x80] sm:$0xf] %v2641
      %2770 = vst [vmem:[#allocation12 + $0x84] sm:$0xf] %v2642
      %2771 = vst [vmem:[#allocation12 + $0x88] sm:$0xf] %v2643
      %2772 = vst [vmem:[#allocation12 + $0x8c] sm:$0xf] %v2644
      %2773 = vst [vmem:[#allocation12 + $0x90] sm:$0xf] %v2645
      %2774 = vst [vmem:[#allocation12 + $0x94] sm:$0xf] %v2646
      %2775 = vst [vmem:[#allocation12 + $0x98] sm:$0xf] %v2647
      %2776 = vst [vmem:[#allocation12 + $0x9c] sm:$0xf] %v2648
      %2777 = vst [vmem:[#allocation12 + $0xa0] sm:$0xf] %v2649
      %2778 = vst [vmem:[#allocation12 + $0xa4] sm:$0xf] %v2650
      %2779 = vst [vmem:[#allocation12 + $0xa8] sm:$0xf] %v2651
      %2780 = vst [vmem:[#allocation12 + $0xac] sm:$0xf] %v2652
      %2781 = vst [vmem:[#allocation12 + $0xb0] sm:$0xf] %v2653
      %2782 = vst [vmem:[#allocation12 + $0xb4] sm:$0xf] %v2654
      %2783 = vst [vmem:[#allocation12 + $0xb8] sm:$0xf] %v2655
      %2784 = vst [vmem:[#allocation12 + $0xbc] sm:$0xf] %v2656
      %2785 = vst [vmem:[#allocation12 + $0xc0] sm:$0xf] %v2657
      %2786 = vst [vmem:[#allocation12 + $0xc4] sm:$0xf] %v2658
      %2787 = vst [vmem:[#allocation12 + $0xc8] sm:$0xf] %v2659
      %2788 = vst [vmem:[#allocation12 + $0xcc] sm:$0xf] %v2660
      %2789 = vst [vmem:[#allocation12 + $0xd0] sm:$0xf] %v2661
      %2790 = vst [vmem:[#allocation12 + $0xd4] sm:$0xf] %v2662
      %2791 = vst [vmem:[#allocation12 + $0xd8] sm:$0xf] %v2663
      %2792 = vst [vmem:[#allocation12 + $0xdc] sm:$0xf] %v2664
      %2793 = vst [vmem:[#allocation12 + $0xe0] sm:$0xf] %v2665
      %2794 = vst [vmem:[#allocation12 + $0xe4] sm:$0xf] %v2666
      %2795 = vst [vmem:[#allocation12 + $0xe8] sm:$0xf] %v2667
      %2796 = vst [vmem:[#allocation12 + $0xec] sm:$0xf] %v2668
      %2797 = vst [vmem:[#allocation12 + $0xf0] sm:$0xf] %v2669
      %2798 = vst [vmem:[#allocation12 + $0xf4] sm:$0xf] %v2670
      %2799 = vst [vmem:[#allocation12 + $0xf8] sm:$0xf] %v2671
      %2800 = vst [vmem:[#allocation12 + $0xfc] sm:$0xf] %v2672
    $region41: #{tpu_custom_call.1} parent=1 // pred_fallthru
      _
    // Predicated region
    $region42: #{tpu_custom_call.1} parent=1 // pred_check
      _
    $region43: #{tpu_custom_call.1} parent=1 // pred_check_branch
      %2802 = sbr.rel (0) target = $region45
    $region44: #{tpu_custom_call.1} parent=1 // pred_region
      %s2804 = ssub.s32 4096, 4096
      %2805 = vsyncadd [#allocation8], %s2804
      %s2806 = sshll.u32 [#allocation12], 4
      %s2807 = int_to_ptr.vmem [resolvable:$true] %s2806
      %2812 = dma.vmem_to_hbm [thread:$0]  %s2807, 4096, %s6, [#allocation8], 64, 64, 4
    $region45: #{tpu_custom_call.1} parent=1 // pred_fallthru
      _
    // Predicated region
    $region46: #{tpu_custom_call.1} parent=1 // pred_check
      _
    $region47: #{tpu_custom_call.1} parent=1 // pred_check_branch
      %2814 = sbr.rel (0) target = $region49
    $region48: #{tpu_custom_call.1} parent=1 // pred_region
      %2815 = dma.done [#allocation8], 4096
    $region49: #{tpu_custom_call.1} parent=1 // pred_fallthru
      _
    %2816 = vsyncpa [#allocation7], 1
    %2817 = vsyncpa [#allocation10], 1
    %2818 = vsyncpa [#allocation8], 1

</llo_original>
